<compile_context>
chip_gen: v7x
topology: tpu7x:2x2x1
jax: 0.10.0
libtpu: 0.0.40
codegen_flags: <defaults>
</compile_context>

<pallas_src>
import math

import jax
import jax.numpy as jnp
from jax import lax
from jax.experimental import pallas as pl
from jax.experimental.pallas import tpu as pltpu


def lstm_recurrence_kernel(gx_ref, whh_ref, h_all_ref):
    """Serial LSTM recurrence, column-major: BN on the lane axis.

    gx_ref   : (T, 4H, BN_t)  precomputed x @ W_ih^T + b_ih + b_hh
                              (gate-major rows, PyTorch order i, f, g, o)
    whh_ref  : (4H, H)        PyTorch weight_hh_l0
    h_all_ref: (T, H, BN_t)   output: hidden state at every timestep
    """
    T, _, BN_t = gx_ref.shape
    H = whh_ref.shape[1]
    whh = whh_ref[...]                       # loop-invariant, hoisted

    def step(t, carry):
        h, c = carry
        # (4H, H) @ (H, BN_t) -> (4H, BN_t); time-t input projection added.
        gates = gx_ref[t] + jnp.dot(whh, h, preferred_element_type=jnp.float32)
        # Fused nonlinearities: one sigmoid over the full 4H block (full vreg
        # EUP occupancy), tanh only on the g slice.  Slices are sublane slices.
        sig = jax.nn.sigmoid(gates)
        i = sig[0 * H:1 * H]
        f = sig[1 * H:2 * H]
        o = sig[3 * H:4 * H]
        g = jnp.tanh(gates[2 * H:3 * H])
        c = f * c + i * g
        h = o * jnp.tanh(c)
        h_all_ref[t] = h                     # (H, BN_t): lane-dense unmasked store
        return (h, c)

    h0 = jnp.zeros((H, BN_t), jnp.float32)
    c0 = jnp.zeros((H, BN_t), jnp.float32)
    # T is small & static: fully unroll so MXU push of step t+1 can overlap
    # the EUP/VPU tail of step t.
    lax.fori_loop(0, T, step, (h0, c0), unroll=True)


def _pick_bn_tile(bn_pad, max_tile=128):
    """bn_pad is a multiple of 128.  A 128-wide lane tile keeps h/c/gates
    vreg-resident in the unrolled recurrence and yields grid >= 2 (both v7x
    TensorCores busy) as soon as BN_pad >= 256."""
    tile = min(max_tile, bn_pad)
    tile -= tile % 128
    tile = max(tile, 128)
    while bn_pad % tile:
        tile -= 128
    return tile


def lstm_only_forward(positions, ego_mask, params, input_dim):
    """positions: (B, T, N, D_pos) f32;  ego_mask: (B, T, N).  Returns (B, N, T, O)."""
    wih, whh, bih, bhh, wfc, bfc = params
    B, T, N, _ = positions.shape
    D = input_dim
    H = whh.shape[1]
    O = wfc.shape[0]
    BN = B * N

    # ---- Glue (plain JAX): the slicing / permutes of the PyTorch forward ----
    feats = positions[..., :D].astype(jnp.float32)                 # (B, T, N, D)
    x_tm = jnp.transpose(feats, (1, 0, 2, 3)).reshape(T, BN, D)    # (T, BN, D), idx b*N+n

    # Input projection hoisted out of the kernel: one batched matmul, bias
    # folded in, emitted directly in the transposed (gate, seq) layout.
    gx = jnp.einsum("tbd,gd->tgb", x_tm, wih,
                    precision=lax.Precision.HIGHEST)               # (T, 4H, BN)
    gx = gx + (bih + bhh)[None, :, None]

    # Pad BN to a multiple of 128 so the lane axis is dense in-kernel.
    BN_pad = ((BN + 127) // 128) * 128
    if BN_pad != BN:
        gx = jnp.pad(gx, ((0, 0), (0, 0), (0, BN_pad - BN)))

    bn_tile = _pick_bn_tile(BN_pad)
    grid = (BN_pad // bn_tile,)

    h_all = pl.pallas_call(
        lstm_recurrence_kernel,
        out_shape=jax.ShapeDtypeStruct((T, H, BN_pad), jnp.float32),
        grid_spec=pltpu.PrefetchScalarGridSpec(
            num_scalar_prefetch=0,
            grid=grid,
            in_specs=[
                pl.BlockSpec((T, 4 * H, bn_tile), lambda n: (0, 0, n)),  # gx
                pl.BlockSpec((4 * H, H), lambda n: (0, 0)),              # W_hh
            ],
            out_specs=pl.BlockSpec((T, H, bn_tile), lambda n: (0, 0, n)),
        ),
        compiler_params=pltpu.CompilerParams(
            dimension_semantics=("parallel",)),    # shards BN tiles over TCs
    )(gx, whh)

    h_all = h_all[:, :, :BN]                                       # drop padding

    # ---- FC + mask outside the kernel (embarrassingly parallel; keeps the
    #      kernel output lane-dense instead of last-dim O=2) ----
    out_tm = jnp.einsum("thb,oh->tbo", h_all, wfc,
                        precision=lax.Precision.HIGHEST) + bfc     # (T, BN, O)
    mask_tm = jnp.transpose(ego_mask, (1, 0, 2)).reshape(T, BN)    # mask[t, b*N+n]
    out_tm = out_tm * mask_tm.astype(out_tm.dtype)[..., None]
    out = jnp.transpose(out_tm, (1, 0, 2)).reshape(B, N, T, O)     # (B, N, T, O)
    return out


def lstm_only_reference(positions, ego_mask, params, input_dim):
    """Pure-JAX reference matching the PyTorch forward (lax.scan LSTM)."""
    wih, whh, bih, bhh, wfc, bfc = params
    B, T, N, _ = positions.shape
    D = input_dim
    H = whh.shape[1]
    O = wfc.shape[0]
    BN = B * N

    feats = positions[..., :D].astype(jnp.float32)
    x = jnp.transpose(feats, (0, 2, 1, 3)).reshape(BN, T, D)       # (BN, T, D)

    def step(carry, xt):
        h, c = carry
        gates = (jnp.dot(xt, wih.T, precision=lax.Precision.HIGHEST) + bih
                 + jnp.dot(h, whh.T, precision=lax.Precision.HIGHEST) + bhh)
        i = jax.nn.sigmoid(gates[:, 0 * H:1 * H])
        f = jax.nn.sigmoid(gates[:, 1 * H:2 * H])
        g = jnp.tanh(gates[:, 2 * H:3 * H])
        o = jax.nn.sigmoid(gates[:, 3 * H:4 * H])
        c = f * c + i * g
        h = o * jnp.tanh(c)
        return (h, c), h

    h0 = jnp.zeros((BN, H), jnp.float32)
    c0 = jnp.zeros((BN, H), jnp.float32)
    _, hs = lax.scan(step, (h0, c0), jnp.transpose(x, (1, 0, 2)))  # (T, BN, H)

    out = jnp.einsum("tbh,oh->tbo", hs, wfc,
                     precision=lax.Precision.HIGHEST) + bfc        # (T, BN, O)
    mask = jnp.transpose(ego_mask, (1, 0, 2)).reshape(T, BN)
    out = out * mask.astype(out.dtype)[..., None]
    return jnp.transpose(out, (1, 0, 2)).reshape(B, N, T, O)


def init_params(key, input_dim, hidden_dim, output_dim):
    """Deterministic PyTorch-style uniform(-1/sqrt(H), 1/sqrt(H)) init."""
    k = 1.0 / math.sqrt(hidden_dim)
    keys = jax.random.split(key, 6)
    wih = jax.random.uniform(keys[0], (4 * hidden_dim, input_dim), jnp.float32, -k, k)
    whh = jax.random.uniform(keys[1], (4 * hidden_dim, hidden_dim), jnp.float32, -k, k)
    bih = jax.random.uniform(keys[2], (4 * hidden_dim,), jnp.float32, -k, k)
    bhh = jax.random.uniform(keys[3], (4 * hidden_dim,), jnp.float32, -k, k)
    wfc = jax.random.uniform(keys[4], (output_dim, hidden_dim), jnp.float32, -k, k)
    bfc = jax.random.uniform(keys[5], (output_dim,), jnp.float32, -k, k)
    return (wih, whh, bih, bhh, wfc, bfc)


if __name__ == "__main__":
    # Small config consistent with the module:
    #   input_dim=4, hidden_dim=32, output_dim=2, timesteps=8, nodes=4, batch=2
    B, T, N = 2, 8, 4
    INPUT_DIM, HIDDEN_DIM, OUTPUT_DIM = 4, 32, 2

    key = jax.random.PRNGKey(0)
    k_pos, k_mask, k_par = jax.random.split(key, 3)

    positions = jax.random.normal(k_pos, (B, T, N, INPUT_DIM), jnp.float32)
    ego_mask = (jax.random.uniform(k_mask, (B, T, N)) > 0.3).astype(jnp.float32)

    params = init_params(k_par, INPUT_DIM, HIDDEN_DIM, OUTPUT_DIM)

    out = lstm_only_forward(positions, ego_mask, params, INPUT_DIM)
    jax.block_until_ready(out)

    assert out.shape == (B, N, T, OUTPUT_DIM), out.shape
    assert bool(jnp.all(jnp.isfinite(out)))

    ref = lstm_only_reference(positions, ego_mask, params, INPUT_DIM)
    jax.block_until_ready(ref)
    assert bool(jnp.allclose(out, ref, atol=1e-4, rtol=1e-4)), (
        float(jnp.max(jnp.abs(out - ref))))

    print("KERNEL_OK")
</pallas_src>

<mosaic_0001>
module attributes {stable_mosaic.version = 11 : i64} {
  func.func @lstm_recurrence_kernel(%arg0: i32, %arg1: memref<8x128x128xf32, #tpu.memory_space<vmem>>, %arg2: memref<128x32xf32, #tpu.memory_space<vmem>>, %arg3: memref<8x32x128xf32, #tpu.memory_space<vmem>>) attributes {dimension_semantics = [#tpu.dimension_semantics<parallel>], iteration_bounds = array<i64: 1>, scalar_prefetch = 0 : i64, scratch_operands = 0 : i64, tpu.core_type = #tpu.core_type<tc>, window_params = [{transform_indices = @transform_0, window_bounds = array<i64: 8, 128, 128>}, {pipeline_mode = #tpu.pipeline_mode<synchronous>, transform_indices = @transform_1, window_bounds = array<i64: 128, 32>}, {transform_indices = @transform_2, window_bounds = array<i64: 8, 32, 128>}]} {
    %c0 = arith.constant 0 : index
    %c0_0 = arith.constant 0 : index
    %0 = vector.load %arg2[%c0, %c0_0] : memref<128x32xf32, #tpu.memory_space<vmem>>, vector<128x32xf32>
    %cst = arith.constant 0.000000e+00 : f32
    %1 = vector.broadcast %cst : f32 to vector<32x128xf32>
    %cst_1 = arith.constant 0.000000e+00 : f32
    %2 = vector.broadcast %cst_1 : f32 to vector<32x128xf32>
    %c0_i32 = arith.constant 0 : i32
    %3 = arith.index_cast %c0_i32 : i32 to index
    %c0_2 = arith.constant 0 : index
    %c0_3 = arith.constant 0 : index
    %4 = vector.load %arg1[%3, %c0_2, %c0_3] : memref<8x128x128xf32, #tpu.memory_space<vmem>>, vector<1x128x128xf32>
    %5 = vector.shape_cast %4 : vector<1x128x128xf32> to vector<128x128xf32>
    %cst_4 = arith.constant dense<0.000000e+00> : vector<128x128xf32>
    %6 = tpu.matmul %0, %1, %cst_4 {dimension_numbers = #tpu.dot_dimension_numbers<[1], [0], [0], [1], [0, 0, 1, 1], [], []>} : vector<128x32xf32>, vector<32x128xf32>, vector<128x128xf32> -> vector<128x128xf32>
    %7 = arith.addf %5, %6 : vector<128x128xf32>
    %8 = arith.negf %7 : vector<128x128xf32>
    %9 = math.exp %8 : vector<128x128xf32>
    %cst_5 = arith.constant 1.000000e+00 : f32
    %10 = vector.broadcast %cst_5 : f32 to vector<128x128xf32>
    %11 = arith.addf %10, %9 : vector<128x128xf32>
    %12 = arith.divf %10, %11 : vector<128x128xf32>
    %13 = vector.extract_strided_slice %12 {offsets = [0, 0], sizes = [32, 128], strides = [1, 1]} : vector<128x128xf32> to vector<32x128xf32>
    %14 = vector.extract_strided_slice %12 {offsets = [32, 0], sizes = [32, 128], strides = [1, 1]} : vector<128x128xf32> to vector<32x128xf32>
    %15 = vector.extract_strided_slice %12 {offsets = [96, 0], sizes = [32, 128], strides = [1, 1]} : vector<128x128xf32> to vector<32x128xf32>
    %16 = vector.extract_strided_slice %7 {offsets = [64, 0], sizes = [32, 128], strides = [1, 1]} : vector<128x128xf32> to vector<32x128xf32>
    %17 = math.tanh %16 : vector<32x128xf32>
    %18 = arith.mulf %14, %2 : vector<32x128xf32>
    %19 = arith.mulf %13, %17 : vector<32x128xf32>
    %20 = arith.addf %18, %19 : vector<32x128xf32>
    %21 = math.tanh %20 : vector<32x128xf32>
    %22 = arith.mulf %15, %21 : vector<32x128xf32>
    %23 = arith.index_cast %c0_i32 : i32 to index
    %c0_6 = arith.constant 0 : index
    %c0_7 = arith.constant 0 : index
    %24 = vector.load %arg3[%23, %c0_6, %c0_7] : memref<8x32x128xf32, #tpu.memory_space<vmem>>, vector<1x32x128xf32>
    %25 = vector.shape_cast %24 : vector<1x32x128xf32> to vector<32x128xf32>
    %26 = vector.shape_cast %22 : vector<32x128xf32> to vector<1x32x128xf32>
    tpu.vector_store %arg3[%23, %c0_6, %c0_7], %26 {strides = array<i32>} : memref<8x32x128xf32, #tpu.memory_space<vmem>>, vector<1x32x128xf32>,
    %c1_i32 = arith.constant 1 : i32
    %27 = arith.index_cast %c1_i32 : i32 to index
    %c0_8 = arith.constant 0 : index
    %c0_9 = arith.constant 0 : index
    %28 = vector.load %arg1[%27, %c0_8, %c0_9] : memref<8x128x128xf32, #tpu.memory_space<vmem>>, vector<1x128x128xf32>
    %29 = vector.shape_cast %28 : vector<1x128x128xf32> to vector<128x128xf32>
    %cst_10 = arith.constant dense<0.000000e+00> : vector<128x128xf32>
    %30 = tpu.matmul %0, %22, %cst_10 {dimension_numbers = #tpu.dot_dimension_numbers<[1], [0], [0], [1], [0, 0, 1, 1], [], []>} : vector<128x32xf32>, vector<32x128xf32>, vector<128x128xf32> -> vector<128x128xf32>
    %31 = arith.addf %29, %30 : vector<128x128xf32>
    %32 = arith.negf %31 : vector<128x128xf32>
    %33 = math.exp %32 : vector<128x128xf32>
    %cst_11 = arith.constant 1.000000e+00 : f32
    %34 = vector.broadcast %cst_11 : f32 to vector<128x128xf32>
    %35 = arith.addf %34, %33 : vector<128x128xf32>
    %36 = arith.divf %34, %35 : vector<128x128xf32>
    %37 = vector.extract_strided_slice %36 {offsets = [0, 0], sizes = [32, 128], strides = [1, 1]} : vector<128x128xf32> to vector<32x128xf32>
    %38 = vector.extract_strided_slice %36 {offsets = [32, 0], sizes = [32, 128], strides = [1, 1]} : vector<128x128xf32> to vector<32x128xf32>
    %39 = vector.extract_strided_slice %36 {offsets = [96, 0], sizes = [32, 128], strides = [1, 1]} : vector<128x128xf32> to vector<32x128xf32>
    %40 = vector.extract_strided_slice %31 {offsets = [64, 0], sizes = [32, 128], strides = [1, 1]} : vector<128x128xf32> to vector<32x128xf32>
    %41 = math.tanh %40 : vector<32x128xf32>
    %42 = arith.mulf %38, %20 : vector<32x128xf32>
    %43 = arith.mulf %37, %41 : vector<32x128xf32>
    %44 = arith.addf %42, %43 : vector<32x128xf32>
    %45 = math.tanh %44 : vector<32x128xf32>
    %46 = arith.mulf %39, %45 : vector<32x128xf32>
    %47 = arith.index_cast %c1_i32 : i32 to index
    %c0_12 = arith.constant 0 : index
    %c0_13 = arith.constant 0 : index
    %48 = vector.load %arg3[%47, %c0_12, %c0_13] : memref<8x32x128xf32, #tpu.memory_space<vmem>>, vector<1x32x128xf32>
    %49 = vector.shape_cast %48 : vector<1x32x128xf32> to vector<32x128xf32>
    %50 = vector.shape_cast %46 : vector<32x128xf32> to vector<1x32x128xf32>
    tpu.vector_store %arg3[%47, %c0_12, %c0_13], %50 {strides = array<i32>} : memref<8x32x128xf32, #tpu.memory_space<vmem>>, vector<1x32x128xf32>,
    %c2_i32 = arith.constant 2 : i32
    %51 = arith.index_cast %c2_i32 : i32 to index
    %c0_14 = arith.constant 0 : index
    %c0_15 = arith.constant 0 : index
    %52 = vector.load %arg1[%51, %c0_14, %c0_15] : memref<8x128x128xf32, #tpu.memory_space<vmem>>, vector<1x128x128xf32>
    %53 = vector.shape_cast %52 : vector<1x128x128xf32> to vector<128x128xf32>
    %cst_16 = arith.constant dense<0.000000e+00> : vector<128x128xf32>
    %54 = tpu.matmul %0, %46, %cst_16 {dimension_numbers = #tpu.dot_dimension_numbers<[1], [0], [0], [1], [0, 0, 1, 1], [], []>} : vector<128x32xf32>, vector<32x128xf32>, vector<128x128xf32> -> vector<128x128xf32>
    %55 = arith.addf %53, %54 : vector<128x128xf32>
    %56 = arith.negf %55 : vector<128x128xf32>
    %57 = math.exp %56 : vector<128x128xf32>
    %cst_17 = arith.constant 1.000000e+00 : f32
    %58 = vector.broadcast %cst_17 : f32 to vector<128x128xf32>
    %59 = arith.addf %58, %57 : vector<128x128xf32>
    %60 = arith.divf %58, %59 : vector<128x128xf32>
    %61 = vector.extract_strided_slice %60 {offsets = [0, 0], sizes = [32, 128], strides = [1, 1]} : vector<128x128xf32> to vector<32x128xf32>
    %62 = vector.extract_strided_slice %60 {offsets = [32, 0], sizes = [32, 128], strides = [1, 1]} : vector<128x128xf32> to vector<32x128xf32>
    %63 = vector.extract_strided_slice %60 {offsets = [96, 0], sizes = [32, 128], strides = [1, 1]} : vector<128x128xf32> to vector<32x128xf32>
    %64 = vector.extract_strided_slice %55 {offsets = [64, 0], sizes = [32, 128], strides = [1, 1]} : vector<128x128xf32> to vector<32x128xf32>
    %65 = math.tanh %64 : vector<32x128xf32>
    %66 = arith.mulf %62, %44 : vector<32x128xf32>
    %67 = arith.mulf %61, %65 : vector<32x128xf32>
    %68 = arith.addf %66, %67 : vector<32x128xf32>
    %69 = math.tanh %68 : vector<32x128xf32>
    %70 = arith.mulf %63, %69 : vector<32x128xf32>
    %71 = arith.index_cast %c2_i32 : i32 to index
    %c0_18 = arith.constant 0 : index
    %c0_19 = arith.constant 0 : index
    %72 = vector.load %arg3[%71, %c0_18, %c0_19] : memref<8x32x128xf32, #tpu.memory_space<vmem>>, vector<1x32x128xf32>
    %73 = vector.shape_cast %72 : vector<1x32x128xf32> to vector<32x128xf32>
    %74 = vector.shape_cast %70 : vector<32x128xf32> to vector<1x32x128xf32>
    tpu.vector_store %arg3[%71, %c0_18, %c0_19], %74 {strides = array<i32>} : memref<8x32x128xf32, #tpu.memory_space<vmem>>, vector<1x32x128xf32>,
    %c3_i32 = arith.constant 3 : i32
    %75 = arith.index_cast %c3_i32 : i32 to index
    %c0_20 = arith.constant 0 : index
    %c0_21 = arith.constant 0 : index
    %76 = vector.load %arg1[%75, %c0_20, %c0_21] : memref<8x128x128xf32, #tpu.memory_space<vmem>>, vector<1x128x128xf32>
    %77 = vector.shape_cast %76 : vector<1x128x128xf32> to vector<128x128xf32>
    %cst_22 = arith.constant dense<0.000000e+00> : vector<128x128xf32>
    %78 = tpu.matmul %0, %70, %cst_22 {dimension_numbers = #tpu.dot_dimension_numbers<[1], [0], [0], [1], [0, 0, 1, 1], [], []>} : vector<128x32xf32>, vector<32x128xf32>, vector<128x128xf32> -> vector<128x128xf32>
    %79 = arith.addf %77, %78 : vector<128x128xf32>
    %80 = arith.negf %79 : vector<128x128xf32>
    %81 = math.exp %80 : vector<128x128xf32>
    %cst_23 = arith.constant 1.000000e+00 : f32
    %82 = vector.broadcast %cst_23 : f32 to vector<128x128xf32>
    %83 = arith.addf %82, %81 : vector<128x128xf32>
    %84 = arith.divf %82, %83 : vector<128x128xf32>
    %85 = vector.extract_strided_slice %84 {offsets = [0, 0], sizes = [32, 128], strides = [1, 1]} : vector<128x128xf32> to vector<32x128xf32>
    %86 = vector.extract_strided_slice %84 {offsets = [32, 0], sizes = [32, 128], strides = [1, 1]} : vector<128x128xf32> to vector<32x128xf32>
    %87 = vector.extract_strided_slice %84 {offsets = [96, 0], sizes = [32, 128], strides = [1, 1]} : vector<128x128xf32> to vector<32x128xf32>
    %88 = vector.extract_strided_slice %79 {offsets = [64, 0], sizes = [32, 128], strides = [1, 1]} : vector<128x128xf32> to vector<32x128xf32>
    %89 = math.tanh %88 : vector<32x128xf32>
    %90 = arith.mulf %86, %68 : vector<32x128xf32>
    %91 = arith.mulf %85, %89 : vector<32x128xf32>
    %92 = arith.addf %90, %91 : vector<32x128xf32>
    %93 = math.tanh %92 : vector<32x128xf32>
    %94 = arith.mulf %87, %93 : vector<32x128xf32>
    %95 = arith.index_cast %c3_i32 : i32 to index
    %c0_24 = arith.constant 0 : index
    %c0_25 = arith.constant 0 : index
    %96 = vector.load %arg3[%95, %c0_24, %c0_25] : memref<8x32x128xf32, #tpu.memory_space<vmem>>, vector<1x32x128xf32>
    %97 = vector.shape_cast %96 : vector<1x32x128xf32> to vector<32x128xf32>
    %98 = vector.shape_cast %94 : vector<32x128xf32> to vector<1x32x128xf32>
    tpu.vector_store %arg3[%95, %c0_24, %c0_25], %98 {strides = array<i32>} : memref<8x32x128xf32, #tpu.memory_space<vmem>>, vector<1x32x128xf32>,
    %c4_i32 = arith.constant 4 : i32
    %99 = arith.index_cast %c4_i32 : i32 to index
    %c0_26 = arith.constant 0 : index
    %c0_27 = arith.constant 0 : index
    %100 = vector.load %arg1[%99, %c0_26, %c0_27] : memref<8x128x128xf32, #tpu.memory_space<vmem>>, vector<1x128x128xf32>
    %101 = vector.shape_cast %100 : vector<1x128x128xf32> to vector<128x128xf32>
    %cst_28 = arith.constant dense<0.000000e+00> : vector<128x128xf32>
    %102 = tpu.matmul %0, %94, %cst_28 {dimension_numbers = #tpu.dot_dimension_numbers<[1], [0], [0], [1], [0, 0, 1, 1], [], []>} : vector<128x32xf32>, vector<32x128xf32>, vector<128x128xf32> -> vector<128x128xf32>
    %103 = arith.addf %101, %102 : vector<128x128xf32>
    %104 = arith.negf %103 : vector<128x128xf32>
    %105 = math.exp %104 : vector<128x128xf32>
    %cst_29 = arith.constant 1.000000e+00 : f32
    %106 = vector.broadcast %cst_29 : f32 to vector<128x128xf32>
    %107 = arith.addf %106, %105 : vector<128x128xf32>
    %108 = arith.divf %106, %107 : vector<128x128xf32>
    %109 = vector.extract_strided_slice %108 {offsets = [0, 0], sizes = [32, 128], strides = [1, 1]} : vector<128x128xf32> to vector<32x128xf32>
    %110 = vector.extract_strided_slice %108 {offsets = [32, 0], sizes = [32, 128], strides = [1, 1]} : vector<128x128xf32> to vector<32x128xf32>
    %111 = vector.extract_strided_slice %108 {offsets = [96, 0], sizes = [32, 128], strides = [1, 1]} : vector<128x128xf32> to vector<32x128xf32>
    %112 = vector.extract_strided_slice %103 {offsets = [64, 0], sizes = [32, 128], strides = [1, 1]} : vector<128x128xf32> to vector<32x128xf32>
    %113 = math.tanh %112 : vector<32x128xf32>
    %114 = arith.mulf %110, %92 : vector<32x128xf32>
    %115 = arith.mulf %109, %113 : vector<32x128xf32>
    %116 = arith.addf %114, %115 : vector<32x128xf32>
    %117 = math.tanh %116 : vector<32x128xf32>
    %118 = arith.mulf %111, %117 : vector<32x128xf32>
    %119 = arith.index_cast %c4_i32 : i32 to index
    %c0_30 = arith.constant 0 : index
    %c0_31 = arith.constant 0 : index
    %120 = vector.load %arg3[%119, %c0_30, %c0_31] : memref<8x32x128xf32, #tpu.memory_space<vmem>>, vector<1x32x128xf32>
    %121 = vector.shape_cast %120 : vector<1x32x128xf32> to vector<32x128xf32>
    %122 = vector.shape_cast %118 : vector<32x128xf32> to vector<1x32x128xf32>
    tpu.vector_store %arg3[%119, %c0_30, %c0_31], %122 {strides = array<i32>} : memref<8x32x128xf32, #tpu.memory_space<vmem>>, vector<1x32x128xf32>,
    %c5_i32 = arith.constant 5 : i32
    %123 = arith.index_cast %c5_i32 : i32 to index
    %c0_32 = arith.constant 0 : index
    %c0_33 = arith.constant 0 : index
    %124 = vector.load %arg1[%123, %c0_32, %c0_33] : memref<8x128x128xf32, #tpu.memory_space<vmem>>, vector<1x128x128xf32>
    %125 = vector.shape_cast %124 : vector<1x128x128xf32> to vector<128x128xf32>
    %cst_34 = arith.constant dense<0.000000e+00> : vector<128x128xf32>
    %126 = tpu.matmul %0, %118, %cst_34 {dimension_numbers = #tpu.dot_dimension_numbers<[1], [0], [0], [1], [0, 0, 1, 1], [], []>} : vector<128x32xf32>, vector<32x128xf32>, vector<128x128xf32> -> vector<128x128xf32>
    %127 = arith.addf %125, %126 : vector<128x128xf32>
    %128 = arith.negf %127 : vector<128x128xf32>
    %129 = math.exp %128 : vector<128x128xf32>
    %cst_35 = arith.constant 1.000000e+00 : f32
    %130 = vector.broadcast %cst_35 : f32 to vector<128x128xf32>
    %131 = arith.addf %130, %129 : vector<128x128xf32>
    %132 = arith.divf %130, %131 : vector<128x128xf32>
    %133 = vector.extract_strided_slice %132 {offsets = [0, 0], sizes = [32, 128], strides = [1, 1]} : vector<128x128xf32> to vector<32x128xf32>
    %134 = vector.extract_strided_slice %132 {offsets = [32, 0], sizes = [32, 128], strides = [1, 1]} : vector<128x128xf32> to vector<32x128xf32>
    %135 = vector.extract_strided_slice %132 {offsets = [96, 0], sizes = [32, 128], strides = [1, 1]} : vector<128x128xf32> to vector<32x128xf32>
    %136 = vector.extract_strided_slice %127 {offsets = [64, 0], sizes = [32, 128], strides = [1, 1]} : vector<128x128xf32> to vector<32x128xf32>
    %137 = math.tanh %136 : vector<32x128xf32>
    %138 = arith.mulf %134, %116 : vector<32x128xf32>
    %139 = arith.mulf %133, %137 : vector<32x128xf32>
    %140 = arith.addf %138, %139 : vector<32x128xf32>
    %141 = math.tanh %140 : vector<32x128xf32>
    %142 = arith.mulf %135, %141 : vector<32x128xf32>
    %143 = arith.index_cast %c5_i32 : i32 to index
    %c0_36 = arith.constant 0 : index
    %c0_37 = arith.constant 0 : index
    %144 = vector.load %arg3[%143, %c0_36, %c0_37] : memref<8x32x128xf32, #tpu.memory_space<vmem>>, vector<1x32x128xf32>
    %145 = vector.shape_cast %144 : vector<1x32x128xf32> to vector<32x128xf32>
    %146 = vector.shape_cast %142 : vector<32x128xf32> to vector<1x32x128xf32>
    tpu.vector_store %arg3[%143, %c0_36, %c0_37], %146 {strides = array<i32>} : memref<8x32x128xf32, #tpu.memory_space<vmem>>, vector<1x32x128xf32>,
    %c6_i32 = arith.constant 6 : i32
    %147 = arith.index_cast %c6_i32 : i32 to index
    %c0_38 = arith.constant 0 : index
    %c0_39 = arith.constant 0 : index
    %148 = vector.load %arg1[%147, %c0_38, %c0_39] : memref<8x128x128xf32, #tpu.memory_space<vmem>>, vector<1x128x128xf32>
    %149 = vector.shape_cast %148 : vector<1x128x128xf32> to vector<128x128xf32>
    %cst_40 = arith.constant dense<0.000000e+00> : vector<128x128xf32>
    %150 = tpu.matmul %0, %142, %cst_40 {dimension_numbers = #tpu.dot_dimension_numbers<[1], [0], [0], [1], [0, 0, 1, 1], [], []>} : vector<128x32xf32>, vector<32x128xf32>, vector<128x128xf32> -> vector<128x128xf32>
    %151 = arith.addf %149, %150 : vector<128x128xf32>
    %152 = arith.negf %151 : vector<128x128xf32>
    %153 = math.exp %152 : vector<128x128xf32>
    %cst_41 = arith.constant 1.000000e+00 : f32
    %154 = vector.broadcast %cst_41 : f32 to vector<128x128xf32>
    %155 = arith.addf %154, %153 : vector<128x128xf32>
    %156 = arith.divf %154, %155 : vector<128x128xf32>
    %157 = vector.extract_strided_slice %156 {offsets = [0, 0], sizes = [32, 128], strides = [1, 1]} : vector<128x128xf32> to vector<32x128xf32>
    %158 = vector.extract_strided_slice %156 {offsets = [32, 0], sizes = [32, 128], strides = [1, 1]} : vector<128x128xf32> to vector<32x128xf32>
    %159 = vector.extract_strided_slice %156 {offsets = [96, 0], sizes = [32, 128], strides = [1, 1]} : vector<128x128xf32> to vector<32x128xf32>
    %160 = vector.extract_strided_slice %151 {offsets = [64, 0], sizes = [32, 128], strides = [1, 1]} : vector<128x128xf32> to vector<32x128xf32>
    %161 = math.tanh %160 : vector<32x128xf32>
    %162 = arith.mulf %158, %140 : vector<32x128xf32>
    %163 = arith.mulf %157, %161 : vector<32x128xf32>
    %164 = arith.addf %162, %163 : vector<32x128xf32>
    %165 = math.tanh %164 : vector<32x128xf32>
    %166 = arith.mulf %159, %165 : vector<32x128xf32>
    %167 = arith.index_cast %c6_i32 : i32 to index
    %c0_42 = arith.constant 0 : index
    %c0_43 = arith.constant 0 : index
    %168 = vector.load %arg3[%167, %c0_42, %c0_43] : memref<8x32x128xf32, #tpu.memory_space<vmem>>, vector<1x32x128xf32>
    %169 = vector.shape_cast %168 : vector<1x32x128xf32> to vector<32x128xf32>
    %170 = vector.shape_cast %166 : vector<32x128xf32> to vector<1x32x128xf32>
    tpu.vector_store %arg3[%167, %c0_42, %c0_43], %170 {strides = array<i32>} : memref<8x32x128xf32, #tpu.memory_space<vmem>>, vector<1x32x128xf32>,
    %c7_i32 = arith.constant 7 : i32
    %171 = arith.index_cast %c7_i32 : i32 to index
    %c0_44 = arith.constant 0 : index
    %c0_45 = arith.constant 0 : index
    %172 = vector.load %arg1[%171, %c0_44, %c0_45] : memref<8x128x128xf32, #tpu.memory_space<vmem>>, vector<1x128x128xf32>
    %173 = vector.shape_cast %172 : vector<1x128x128xf32> to vector<128x128xf32>
    %cst_46 = arith.constant dense<0.000000e+00> : vector<128x128xf32>
    %174 = tpu.matmul %0, %166, %cst_46 {dimension_numbers = #tpu.dot_dimension_numbers<[1], [0], [0], [1], [0, 0, 1, 1], [], []>} : vector<128x32xf32>, vector<32x128xf32>, vector<128x128xf32> -> vector<128x128xf32>
    %175 = arith.addf %173, %174 : vector<128x128xf32>
    %176 = arith.negf %175 : vector<128x128xf32>
    %177 = math.exp %176 : vector<128x128xf32>
    %cst_47 = arith.constant 1.000000e+00 : f32
    %178 = vector.broadcast %cst_47 : f32 to vector<128x128xf32>
    %179 = arith.addf %178, %177 : vector<128x128xf32>
    %180 = arith.divf %178, %179 : vector<128x128xf32>
    %181 = vector.extract_strided_slice %180 {offsets = [0, 0], sizes = [32, 128], strides = [1, 1]} : vector<128x128xf32> to vector<32x128xf32>
    %182 = vector.extract_strided_slice %180 {offsets = [32, 0], sizes = [32, 128], strides = [1, 1]} : vector<128x128xf32> to vector<32x128xf32>
    %183 = vector.extract_strided_slice %180 {offsets = [96, 0], sizes = [32, 128], strides = [1, 1]} : vector<128x128xf32> to vector<32x128xf32>
    %184 = vector.extract_strided_slice %175 {offsets = [64, 0], sizes = [32, 128], strides = [1, 1]} : vector<128x128xf32> to vector<32x128xf32>
    %185 = math.tanh %184 : vector<32x128xf32>
    %186 = arith.mulf %182, %164 : vector<32x128xf32>
    %187 = arith.mulf %181, %185 : vector<32x128xf32>
    %188 = arith.addf %186, %187 : vector<32x128xf32>
    %189 = math.tanh %188 : vector<32x128xf32>
    %190 = arith.mulf %183, %189 : vector<32x128xf32>
    %191 = arith.index_cast %c7_i32 : i32 to index
    %c0_48 = arith.constant 0 : index
    %c0_49 = arith.constant 0 : index
    %192 = vector.load %arg3[%191, %c0_48, %c0_49] : memref<8x32x128xf32, #tpu.memory_space<vmem>>, vector<1x32x128xf32>
    %193 = vector.shape_cast %192 : vector<1x32x128xf32> to vector<32x128xf32>
    %194 = vector.shape_cast %190 : vector<32x128xf32> to vector<1x32x128xf32>
    tpu.vector_store %arg3[%191, %c0_48, %c0_49], %194 {strides = array<i32>} : memref<8x32x128xf32, #tpu.memory_space<vmem>>, vector<1x32x128xf32>,
    %c8_i32 = arith.constant 8 : i32
    return
  }
  func.func @transform_0(%arg0: i32) -> (i32, i32, i32) {
    %c0_i32 = arith.constant 0 : i32
    %c0_i32_0 = arith.constant 0 : i32
    %c0_i32_1 = arith.constant 0 : i32
    return %c0_i32, %c0_i32_0, %arg0 : i32, i32, i32
  }
  func.func @transform_1(%arg0: i32) -> (i32, i32) {
    %c0_i32 = arith.constant 0 : i32
    %c0_i32_0 = arith.constant 0 : i32
    %c0_i32_1 = arith.constant 0 : i32
    return %c0_i32, %c0_i32_0 : i32, i32
  }
  func.func @transform_2(%arg0: i32) -> (i32, i32, i32) {
    %c0_i32 = arith.constant 0 : i32
    %c0_i32_0 = arith.constant 0 : i32
    %c0_i32_1 = arith.constant 0 : i32
    return %c0_i32, %c0_i32_0, %arg0 : i32, i32, i32
  }
}

</mosaic_0001>

<llo_original>
// kernel: tpu_custom_call.1
$region0: #{tpu_custom_call.1}
  #allocation0 [shape = 'u32[]', space=smem, size = 0x4, offset = 0x4, fixed_abs, tag = 'smem constant byte address 0x4 - core index']
  #allocation1 [shape = 'u32[144,128]{1,0:T(1,128)}', space=vmem, size = 0x12000, scoped, tag = 'internal scratch']
  %s0 = inlined_call_operand.hbm [shape: f32[8,128,128], index: 0, kind: input, shape index: {}]
  %s1 = inlined_call_operand.vmem [shape: f32[128,32], index: 1, kind: input, shape index: {}]
  %s2 = inlined_call_operand.hbm [shape: f32[8,32,128], index: 2, kind: output, shape index: {}]
  %s3 = sld [smem:[#allocation0]]
  $region22: #{tpu_custom_call.1} parent=0
    _
  %s5 = ssub.s32 1, %s3
  %s6 = scalar_select 0, %s5, %s3
  $region1: #{tpu_custom_call.1} parent=0
    #allocation2 [shape = 'u8[524288]{0}', space=vmem, size = 0x80000, scoped, tag = 'input window, operand 0, single buffered']
    #allocation3 [shape = 's32[1]{0}', space=sflag, size = 0x4, scoped, tag = 'scoped memory for tpu_custom_call.1']
    #allocation4 [shape = 's32[1]{0}', space=sflag, size = 0x4, scoped, tag = 'scoped memory for tpu_custom_call.1']
    #allocation5 [shape = 'u8[131072]{0}', space=vmem, size = 0x20000, scoped, tag = 'output window, operand 0, single buffered']
    %7 = vsyncpa [#allocation3], 0
    %8 = vsyncpa [#allocation4], 0
    // Predicated region
    $region2: #{tpu_custom_call.1} parent=1 // pred_check
      _
    $region3: #{tpu_custom_call.1} parent=1 // pred_check_branch
      %10 = sbr.rel (0) target = $region5
    $region4: #{tpu_custom_call.1} parent=1 // pred_region
      %s12 = ssub.s32 16384, 16384
      %13 = vsyncadd [#allocation3], %s12
      %s14 = sshll.u32 [#allocation2], 4
      %s15 = int_to_ptr.vmem [resolvable:$true] %s14
      %20 = dma.hbm_to_vmem [thread:$0]  %s0, 16384, %s15, [#allocation3], 128, 128, 8
    $region5: #{tpu_custom_call.1} parent=1 // pred_fallthru
      _
    // Predicated region
    $region6: #{tpu_custom_call.1} parent=1 // pred_check
      _
    $region7: #{tpu_custom_call.1} parent=1 // pred_check_branch
      %22 = sbr.rel (0) target = $region9
    $region8: #{tpu_custom_call.1} parent=1 // pred_region
      _
    $region9: #{tpu_custom_call.1} parent=1 // pred_fallthru
      _
    // Predicated region
    $region10: #{tpu_custom_call.1} parent=1 // pred_check
      _
    $region11: #{tpu_custom_call.1} parent=1 // pred_check_branch
      %24 = sbr.rel (0) target = $region13
    $region12: #{tpu_custom_call.1} parent=1 // pred_region
      %25 = dma.done [#allocation3], 16384
    $region13: #{tpu_custom_call.1} parent=1 // pred_fallthru
      _
    %v26 = vld [vmem:[%s1] sm:$0xff]
    %v27 = vld [vmem:[%s1 + $0x8] sm:$0xff]
    %v28 = vld [vmem:[%s1 + $0x10] sm:$0xff]
    %v29 = vld [vmem:[%s1 + $0x18] sm:$0xff]
    %v30 = vld [vmem:[%s1 + $0x20] sm:$0xff]
    %v31 = vld [vmem:[%s1 + $0x28] sm:$0xff]
    %v32 = vld [vmem:[%s1 + $0x30] sm:$0xff]
    %v33 = vld [vmem:[%s1 + $0x38] sm:$0xff]
    %v34 = vld [vmem:[%s1 + $0x40] sm:$0xff]
    %v35 = vld [vmem:[%s1 + $0x48] sm:$0xff]
    %v36 = vld [vmem:[%s1 + $0x50] sm:$0xff]
    %v37 = vld [vmem:[%s1 + $0x58] sm:$0xff]
    %v38 = vld [vmem:[%s1 + $0x60] sm:$0xff]
    %v39 = vld [vmem:[%s1 + $0x68] sm:$0xff]
    %v40 = vld [vmem:[%s1 + $0x70] sm:$0xff]
    %v41 = vld [vmem:[%s1 + $0x78] sm:$0xff]
    %v42 = vld [vmem:[#allocation2] sm:$0xff]
    %v43 = vld [vmem:[#allocation2 + $0x8] sm:$0xff]
    %v44 = vld [vmem:[#allocation2 + $0x10] sm:$0xff]
    %v45 = vld [vmem:[#allocation2 + $0x18] sm:$0xff]
    %v46 = vld [vmem:[#allocation2 + $0x20] sm:$0xff]
    %v47 = vld [vmem:[#allocation2 + $0x28] sm:$0xff]
    %v48 = vld [vmem:[#allocation2 + $0x30] sm:$0xff]
    %v49 = vld [vmem:[#allocation2 + $0x38] sm:$0xff]
    %v50 = vld [vmem:[#allocation2 + $0x40] sm:$0xff]
    %v51 = vld [vmem:[#allocation2 + $0x48] sm:$0xff]
    %v52 = vld [vmem:[#allocation2 + $0x50] sm:$0xff]
    %v53 = vld [vmem:[#allocation2 + $0x58] sm:$0xff]
    %v54 = vld [vmem:[#allocation2 + $0x60] sm:$0xff]
    %v55 = vld [vmem:[#allocation2 + $0x68] sm:$0xff]
    %v56 = vld [vmem:[#allocation2 + $0x70] sm:$0xff]
    %v57 = vld [vmem:[#allocation2 + $0x78] sm:$0xff]
    %vm58 = vcmask 261120
    %v60 = vsel %vm58, %v26, 0
    %v63 = vsel %vm58, %v27, 0
    %v66 = vsel %vm58, %v28, 0
    %v69 = vsel %vm58, %v29, 0
    %v72 = vsel %vm58, %v30, 0
    %v75 = vsel %vm58, %v31, 0
    %v78 = vsel %vm58, %v32, 0
    %v81 = vsel %vm58, %v33, 0
    %v84 = vsel %vm58, %v34, 0
    %v87 = vsel %vm58, %v35, 0
    %v90 = vsel %vm58, %v36, 0
    %v93 = vsel %vm58, %v37, 0
    %v96 = vsel %vm58, %v38, 0
    %v99 = vsel %vm58, %v39, 0
    %v102 = vsel %vm58, %v40, 0
    %v105 = vsel %vm58, %v41, 0
    %107 = vmatprep.subr.mxu0 0.0
    %108 = vmatpush1.msra.mxu0 0.0
    %109 = vmatprep.subr.mxu0 0.0
    %110 = vmatpush1.msra.mxu0 0.0
    %111 = vmatprep.subr.mxu0 0.0
    %112 = vmatpush1.msra.mxu0 0.0
    %113 = vmatprep.subr.mxu0 0.0
    %114 = vmatpush1.msra.mxu0 0.0
    %115 = vmatprep.subr.mxu0 0.0
    %116 = vmatpush1.msra.mxu0 0.0
    %117 = vmatprep.subr.mxu0 0.0
    %118 = vmatpush1.msra.mxu0 0.0
    %119 = vmatprep.subr.mxu0 0.0
    %120 = vmatpush1.msra.mxu0 0.0
    %121 = vmatprep.subr.mxu0 0.0
    %122 = vmatpush1.msra.mxu0 0.0
    %123 = vmatprep.subr.mxu0 0.0
    %124 = vmatpush1.msra.mxu0 0.0
    %125 = vmatprep.subr.mxu0 0.0
    %126 = vmatpush1.msra.mxu0 0.0
    %127 = vmatprep.subr.mxu0 0.0
    %128 = vmatpush1.msra.mxu0 0.0
    %129 = vmatprep.subr.mxu0 0.0
    %130 = vmatpush1.msra.mxu0 0.0
    %131 = vmatprep.subr.mxu0 0.0
    %132 = vmatpush1.msra.mxu0 0.0
    %133 = vmatprep.subr.mxu0 0.0
    %134 = vmatpush1.msra.mxu0 0.0
    %135 = vmatprep.subr.mxu0 0.0
    %136 = vmatpush1.msra.mxu0 0.0
    %137 = vmatprep.subr.mxu0 0.0
    %138 = vmatpush1.msra.mxu0 0.0
    %139 = vmatprep.subr.mxu0 0.0
    %140 = vmatpush1.msra.mxu0 0.0
    %141 = vmatprep.subr.mxu0 0.0
    %142 = vmatpush1.msra.mxu0 0.0
    %143 = vmatprep.subr.mxu0 0.0
    %144 = vmatpush1.msra.mxu0 0.0
    %145 = vmatprep.subr.mxu0 0.0
    %146 = vmatpush1.msra.mxu0 0.0
    %147 = vmatprep.subr.mxu0 0.0
    %148 = vmatpush1.msra.mxu0 0.0
    %149 = vmatprep.subr.mxu0 0.0
    %150 = vmatpush1.msra.mxu0 0.0
    %151 = vmatprep.subr.mxu0 0.0
    %152 = vmatpush1.msra.mxu0 0.0
    %153 = vmatprep.subr.mxu0 0.0
    %154 = vmatpush1.msra.mxu0 0.0
    %155 = vmatprep.subr.mxu0 0.0
    %156 = vmatpush1.msra.mxu0 0.0
    %157 = vmatprep.subr.mxu0 0.0
    %158 = vmatpush1.msra.mxu0 0.0
    %159 = vmatprep.subr.mxu0 0.0
    %160 = vmatpush1.msra.mxu0 0.0
    %161 = vmatprep.subr.mxu0 0.0
    %162 = vmatpush1.msra.mxu0 0.0
    %163 = vmatprep.subr.mxu0 0.0
    %164 = vmatpush1.msra.mxu0 0.0
    %165 = vmatprep.subr.mxu0 0.0
    %166 = vmatpush1.msra.mxu0 0.0
    %167 = vmatprep.subr.mxu0 0.0
    %168 = vmatpush1.msra.mxu0 0.0
    %169 = vmatprep.subr.mxu0 0.0
    %170 = vmatpush1.msra.mxu0 0.0
    %171 = vmatprep.mubr.f32.mxu0 0.0
    %172 = vmatmul.mubr.f32.gmra.mrb[0].mxu0 %v60
    %v173 = vpop.f32.mrb[0].mxu0
    %v174 = vadd.f32 0.0, %v173
    %v175 = vpop.f32.mrb[0].mxu0
    %176 = vmatprep.mubr.f32.mxu0 0.0
    %177 = vmatmul.mubr.f32.gmra.mrb[0].mxu0 %v63
    %v178 = vpop.f32.mrb[0].mxu0
    %v179 = vadd.f32 0.0, %v178
    %v180 = vpop.f32.mrb[0].mxu0
    %181 = vmatprep.mubr.f32.mxu0 0.0
    %182 = vmatmul.mubr.f32.gmra.mrb[0].mxu0 %v66
    %v183 = vpop.f32.mrb[0].mxu0
    %v184 = vadd.f32 0.0, %v183
    %v185 = vpop.f32.mrb[0].mxu0
    %186 = vmatprep.mubr.f32.mxu0 0.0
    %187 = vmatmul.mubr.f32.gmra.mrb[0].mxu0 %v69
    %v188 = vpop.f32.mrb[0].mxu0
    %v189 = vadd.f32 0.0, %v188
    %v190 = vpop.f32.mrb[0].mxu0
    %191 = vmatprep.mubr.f32.mxu0 0.0
    %192 = vmatmul.mubr.f32.gmra.mrb[0].mxu0 %v72
    %v193 = vpop.f32.mrb[0].mxu0
    %v194 = vadd.f32 0.0, %v193
    %v195 = vpop.f32.mrb[0].mxu0
    %196 = vmatprep.mubr.f32.mxu0 0.0
    %197 = vmatmul.mubr.f32.gmra.mrb[0].mxu0 %v75
    %v198 = vpop.f32.mrb[0].mxu0
    %v199 = vadd.f32 0.0, %v198
    %v200 = vpop.f32.mrb[0].mxu0
    %201 = vmatprep.mubr.f32.mxu0 0.0
    %202 = vmatmul.mubr.f32.gmra.mrb[0].mxu0 %v78
    %v203 = vpop.f32.mrb[0].mxu0
    %v204 = vadd.f32 0.0, %v203
    %v205 = vpop.f32.mrb[0].mxu0
    %206 = vmatprep.mubr.f32.mxu0 0.0
    %207 = vmatmul.mubr.f32.gmra.mrb[0].mxu0 %v81
    %v208 = vpop.f32.mrb[0].mxu0
    %v209 = vadd.f32 0.0, %v208
    %v210 = vpop.f32.mrb[0].mxu0
    %211 = vmatprep.mubr.f32.mxu0 0.0
    %212 = vmatmul.mubr.f32.gmra.mrb[0].mxu0 %v84
    %v213 = vpop.f32.mrb[0].mxu0
    %v214 = vadd.f32 0.0, %v213
    %v215 = vpop.f32.mrb[0].mxu0
    %216 = vmatprep.mubr.f32.mxu0 0.0
    %217 = vmatmul.mubr.f32.gmra.mrb[0].mxu0 %v87
    %v218 = vpop.f32.mrb[0].mxu0
    %v219 = vadd.f32 0.0, %v218
    %v220 = vpop.f32.mrb[0].mxu0
    %221 = vmatprep.mubr.f32.mxu0 0.0
    %222 = vmatmul.mubr.f32.gmra.mrb[0].mxu0 %v90
    %v223 = vpop.f32.mrb[0].mxu0
    %v224 = vadd.f32 0.0, %v223
    %v225 = vpop.f32.mrb[0].mxu0
    %226 = vmatprep.mubr.f32.mxu0 0.0
    %227 = vmatmul.mubr.f32.gmra.mrb[0].mxu0 %v93
    %v228 = vpop.f32.mrb[0].mxu0
    %v229 = vadd.f32 0.0, %v228
    %v230 = vpop.f32.mrb[0].mxu0
    %231 = vmatprep.mubr.f32.mxu0 0.0
    %232 = vmatmul.mubr.f32.gmra.mrb[0].mxu0 %v96
    %v233 = vpop.f32.mrb[0].mxu0
    %v234 = vadd.f32 0.0, %v233
    %v235 = vpop.f32.mrb[0].mxu0
    %236 = vmatprep.mubr.f32.mxu0 0.0
    %237 = vmatmul.mubr.f32.gmra.mrb[0].mxu0 %v99
    %v238 = vpop.f32.mrb[0].mxu0
    %v239 = vadd.f32 0.0, %v238
    %v240 = vpop.f32.mrb[0].mxu0
    %241 = vmatprep.mubr.f32.mxu0 0.0
    %242 = vmatmul.mubr.f32.gmra.mrb[0].mxu0 %v102
    %v243 = vpop.f32.mrb[0].mxu0
    %v244 = vadd.f32 0.0, %v243
    %v245 = vpop.f32.mrb[0].mxu0
    %246 = vmatprep.mubr.f32.mxu0 0.0
    %247 = vmatmul.mubr.f32.gmra.mrb[0].mxu0 %v105
    %v248 = vpop.f32.mrb[0].mxu0
    %v249 = vadd.f32 0.0, %v248
    %v250 = vpop.f32.mrb[0].mxu0
    %251 = vdwg.mxu0
    %v252 = vadd.f32 %v42, %v174
    %v253 = vadd.f32 %v43, %v179
    %v254 = vadd.f32 %v44, %v184
    %v255 = vadd.f32 %v45, %v189
    %v256 = vadd.f32 %v46, %v194
    %v257 = vadd.f32 %v47, %v199
    %v258 = vadd.f32 %v48, %v204
    %v259 = vadd.f32 %v49, %v209
    %v260 = vadd.f32 %v50, %v214
    %v261 = vadd.f32 %v51, %v219
    %v262 = vadd.f32 %v52, %v224
    %v263 = vadd.f32 %v53, %v229
    %v264 = vadd.f32 %v54, %v234
    %v265 = vadd.f32 %v55, %v239
    %v266 = vadd.f32 %v56, %v244
    %v267 = vadd.f32 %v57, %v249
    %v268 = vxor.u32 %v252, 2147483648
    %v269 = vxor.u32 %v253, 2147483648
    %v270 = vxor.u32 %v254, 2147483648
    %v271 = vxor.u32 %v255, 2147483648
    %v272 = vxor.u32 %v256, 2147483648
    %v273 = vxor.u32 %v257, 2147483648
    %v274 = vxor.u32 %v258, 2147483648
    %v275 = vxor.u32 %v259, 2147483648
    %v276 = vxor.u32 %v264, 2147483648
    %v277 = vxor.u32 %v265, 2147483648
    %v278 = vxor.u32 %v266, 2147483648
    %v279 = vxor.u32 %v267, 2147483648
    %v280 = vmul.f32 %v268, 1.442695
    %v281 = vpow.pop %v280
    %v282 = vmul.f32 %v269, 1.442695
    %v283 = vpow.pop %v282
    %v284 = vmul.f32 %v270, 1.442695
    %v285 = vpow.pop %v284
    %v286 = vmul.f32 %v271, 1.442695
    %v287 = vpow.pop %v286
    %v288 = vmul.f32 %v272, 1.442695
    %v289 = vpow.pop %v288
    %v290 = vmul.f32 %v273, 1.442695
    %v291 = vpow.pop %v290
    %v292 = vmul.f32 %v274, 1.442695
    %v293 = vpow.pop %v292
    %v294 = vmul.f32 %v275, 1.442695
    %v295 = vpow.pop %v294
    %v296 = vmul.f32 %v276, 1.442695
    %v297 = vpow.pop %v296
    %v298 = vmul.f32 %v277, 1.442695
    %v299 = vpow.pop %v298
    %v300 = vmul.f32 %v278, 1.442695
    %v301 = vpow.pop %v300
    %v302 = vmul.f32 %v279, 1.442695
    %v303 = vpow.pop %v302
    %v304 = vadd.f32 %v281, 1.0
    %v305 = vadd.f32 %v283, 1.0
    %v306 = vadd.f32 %v285, 1.0
    %v307 = vadd.f32 %v287, 1.0
    %v308 = vadd.f32 %v289, 1.0
    %v309 = vadd.f32 %v291, 1.0
    %v310 = vadd.f32 %v293, 1.0
    %v311 = vadd.f32 %v295, 1.0
    %v312 = vadd.f32 %v297, 1.0
    %v313 = vadd.f32 %v299, 1.0
    %v314 = vadd.f32 %v301, 1.0
    %v315 = vadd.f32 %v303, 1.0
    %v316 = vrcp.pop %v304
    %v317 = vmul.f32 1.0, %v316
    %v318 = vrcp.pop %v305
    %v319 = vmul.f32 1.0, %v318
    %v320 = vrcp.pop %v306
    %v321 = vmul.f32 1.0, %v320
    %v322 = vrcp.pop %v307
    %v323 = vmul.f32 1.0, %v322
    %v324 = vrcp.pop %v308
    %v325 = vmul.f32 1.0, %v324
    %v326 = vrcp.pop %v309
    %v327 = vmul.f32 1.0, %v326
    %v328 = vrcp.pop %v310
    %v329 = vmul.f32 1.0, %v328
    %v330 = vrcp.pop %v311
    %v331 = vmul.f32 1.0, %v330
    %v332 = vrcp.pop %v312
    %v333 = vmul.f32 1.0, %v332
    %v334 = vrcp.pop %v313
    %v335 = vmul.f32 1.0, %v334
    %v336 = vrcp.pop %v314
    %v337 = vmul.f32 1.0, %v336
    %v338 = vrcp.pop %v315
    %v339 = vmul.f32 1.0, %v338
    %v340 = vtanh.pop %v260
    %v341 = vtanh.pop %v261
    %v342 = vtanh.pop %v262
    %v343 = vtanh.pop %v263
    %v344 = vmul.f32 %v325, 0.0
    %v345 = vmul.f32 %v327, 0.0
    %v346 = vmul.f32 %v329, 0.0
    %v347 = vmul.f32 %v331, 0.0
    %v348 = vmul.f32 %v317, %v340
    %v349 = vmul.f32 %v319, %v341
    %v350 = vmul.f32 %v321, %v342
    %v351 = vmul.f32 %v323, %v343
    %v352 = vadd.f32 %v344, %v348
    %v353 = vadd.f32 %v345, %v349
    %v354 = vadd.f32 %v346, %v350
    %v355 = vadd.f32 %v347, %v351
    %v356 = vtanh.pop %v352
    %v357 = vtanh.pop %v353
    %v358 = vtanh.pop %v354
    %v359 = vtanh.pop %v355
    %v360 = vmul.f32 %v333, %v356
    %v361 = vmul.f32 %v335, %v357
    %v362 = vmul.f32 %v337, %v358
    %v363 = vmul.f32 %v339, %v359
    %364 = vst [vmem:[#allocation5] sm:$0xff] %v360
    %365 = vst [vmem:[#allocation5 + $0x8] sm:$0xff] %v361
    %366 = vst [vmem:[#allocation5 + $0x10] sm:$0xff] %v362
    %367 = vst [vmem:[#allocation5 + $0x18] sm:$0xff] %v363
    %s368 = scalar_lea.vmem [#allocation2], 128
    %v369 = vld [vmem:[%s368] sm:$0xff]
    %v370 = vld [vmem:[%s368 + $0x8] sm:$0xff]
    %v371 = vld [vmem:[%s368 + $0x10] sm:$0xff]
    %v372 = vld [vmem:[%s368 + $0x18] sm:$0xff]
    %v373 = vld [vmem:[%s368 + $0x20] sm:$0xff]
    %v374 = vld [vmem:[%s368 + $0x28] sm:$0xff]
    %v375 = vld [vmem:[%s368 + $0x30] sm:$0xff]
    %v376 = vld [vmem:[%s368 + $0x38] sm:$0xff]
    %v377 = vld [vmem:[%s368 + $0x40] sm:$0xff]
    %v378 = vld [vmem:[%s368 + $0x48] sm:$0xff]
    %v379 = vld [vmem:[%s368 + $0x50] sm:$0xff]
    %v380 = vld [vmem:[%s368 + $0x58] sm:$0xff]
    %v381 = vld [vmem:[%s368 + $0x60] sm:$0xff]
    %v382 = vld [vmem:[%s368 + $0x68] sm:$0xff]
    %v383 = vld [vmem:[%s368 + $0x70] sm:$0xff]
    %v384 = vld [vmem:[%s368 + $0x78] sm:$0xff]
    %385 = vmatprep.subr.mxu0 0.0
    %386 = vmatpush1.msra.mxu0 %v360
    %387 = vmatprep.subr.mxu0 0.0
    %388 = vmatpush1.msra.mxu0 %v361
    %389 = vmatprep.subr.mxu0 0.0
    %390 = vmatpush1.msra.mxu0 %v362
    %391 = vmatprep.subr.mxu0 0.0
    %392 = vmatpush1.msra.mxu0 %v363
    %393 = vmatprep.subr.mxu0 0.0
    %394 = vmatpush1.msra.mxu0 0.0
    %395 = vmatprep.subr.mxu0 0.0
    %396 = vmatpush1.msra.mxu0 0.0
    %397 = vmatprep.subr.mxu0 0.0
    %398 = vmatpush1.msra.mxu0 0.0
    %399 = vmatprep.subr.mxu0 0.0
    %400 = vmatpush1.msra.mxu0 0.0
    %401 = vmatprep.subr.mxu0 0.0
    %402 = vmatpush1.msra.mxu0 0.0
    %403 = vmatprep.subr.mxu0 0.0
    %404 = vmatpush1.msra.mxu0 0.0
    %405 = vmatprep.subr.mxu0 0.0
    %406 = vmatpush1.msra.mxu0 0.0
    %407 = vmatprep.subr.mxu0 0.0
    %408 = vmatpush1.msra.mxu0 0.0
    %409 = vmatprep.subr.mxu0 0.0
    %410 = vmatpush1.msra.mxu0 0.0
    %411 = vmatprep.subr.mxu0 0.0
    %412 = vmatpush1.msra.mxu0 0.0
    %413 = vmatprep.subr.mxu0 0.0
    %414 = vmatpush1.msra.mxu0 0.0
    %415 = vmatprep.subr.mxu0 0.0
    %416 = vmatpush1.msra.mxu0 0.0
    %417 = vmatprep.subr.mxu0 0.0
    %418 = vmatpush1.msra.mxu0 0.0
    %419 = vmatprep.subr.mxu0 0.0
    %420 = vmatpush1.msra.mxu0 0.0
    %421 = vmatprep.subr.mxu0 0.0
    %422 = vmatpush1.msra.mxu0 0.0
    %423 = vmatprep.subr.mxu0 0.0
    %424 = vmatpush1.msra.mxu0 0.0
    %425 = vmatprep.subr.mxu0 0.0
    %426 = vmatpush1.msra.mxu0 0.0
    %427 = vmatprep.subr.mxu0 0.0
    %428 = vmatpush1.msra.mxu0 0.0
    %429 = vmatprep.subr.mxu0 0.0
    %430 = vmatpush1.msra.mxu0 0.0
    %431 = vmatprep.subr.mxu0 0.0
    %432 = vmatpush1.msra.mxu0 0.0
    %433 = vmatprep.subr.mxu0 0.0
    %434 = vmatpush1.msra.mxu0 0.0
    %435 = vmatprep.subr.mxu0 0.0
    %436 = vmatpush1.msra.mxu0 0.0
    %437 = vmatprep.subr.mxu0 0.0
    %438 = vmatpush1.msra.mxu0 0.0
    %439 = vmatprep.subr.mxu0 0.0
    %440 = vmatpush1.msra.mxu0 0.0
    %441 = vmatprep.subr.mxu0 0.0
    %442 = vmatpush1.msra.mxu0 0.0
    %443 = vmatprep.subr.mxu0 0.0
    %444 = vmatpush1.msra.mxu0 0.0
    %445 = vmatprep.subr.mxu0 0.0
    %446 = vmatpush1.msra.mxu0 0.0
    %447 = vmatprep.subr.mxu0 0.0
    %448 = vmatpush1.msra.mxu0 0.0
    %449 = vmatprep.mubr.f32.mxu0 0.0
    %450 = vmatmul.mubr.f32.gmra.mrb[0].mxu0 %v60
    %v451 = vpop.f32.mrb[0].mxu0
    %v452 = vadd.f32 0.0, %v451
    %v453 = vpop.f32.mrb[0].mxu0
    %454 = vmatprep.mubr.f32.mxu0 0.0
    %455 = vmatmul.mubr.f32.gmra.mrb[0].mxu0 %v63
    %v456 = vpop.f32.mrb[0].mxu0
    %v457 = vadd.f32 0.0, %v456
    %v458 = vpop.f32.mrb[0].mxu0
    %459 = vmatprep.mubr.f32.mxu0 0.0
    %460 = vmatmul.mubr.f32.gmra.mrb[0].mxu0 %v66
    %v461 = vpop.f32.mrb[0].mxu0
    %v462 = vadd.f32 0.0, %v461
    %v463 = vpop.f32.mrb[0].mxu0
    %464 = vmatprep.mubr.f32.mxu0 0.0
    %465 = vmatmul.mubr.f32.gmra.mrb[0].mxu0 %v69
    %v466 = vpop.f32.mrb[0].mxu0
    %v467 = vadd.f32 0.0, %v466
    %v468 = vpop.f32.mrb[0].mxu0
    %469 = vmatprep.mubr.f32.mxu0 0.0
    %470 = vmatmul.mubr.f32.gmra.mrb[0].mxu0 %v72
    %v471 = vpop.f32.mrb[0].mxu0
    %v472 = vadd.f32 0.0, %v471
    %v473 = vpop.f32.mrb[0].mxu0
    %474 = vmatprep.mubr.f32.mxu0 0.0
    %475 = vmatmul.mubr.f32.gmra.mrb[0].mxu0 %v75
    %v476 = vpop.f32.mrb[0].mxu0
    %v477 = vadd.f32 0.0, %v476
    %v478 = vpop.f32.mrb[0].mxu0
    %479 = vmatprep.mubr.f32.mxu0 0.0
    %480 = vmatmul.mubr.f32.gmra.mrb[0].mxu0 %v78
    %v481 = vpop.f32.mrb[0].mxu0
    %v482 = vadd.f32 0.0, %v481
    %v483 = vpop.f32.mrb[0].mxu0
    %484 = vmatprep.mubr.f32.mxu0 0.0
    %485 = vmatmul.mubr.f32.gmra.mrb[0].mxu0 %v81
    %v486 = vpop.f32.mrb[0].mxu0
    %v487 = vadd.f32 0.0, %v486
    %v488 = vpop.f32.mrb[0].mxu0
    %489 = vmatprep.mubr.f32.mxu0 0.0
    %490 = vmatmul.mubr.f32.gmra.mrb[0].mxu0 %v84
    %v491 = vpop.f32.mrb[0].mxu0
    %v492 = vadd.f32 0.0, %v491
    %v493 = vpop.f32.mrb[0].mxu0
    %494 = vmatprep.mubr.f32.mxu0 0.0
    %495 = vmatmul.mubr.f32.gmra.mrb[0].mxu0 %v87
    %v496 = vpop.f32.mrb[0].mxu0
    %v497 = vadd.f32 0.0, %v496
    %v498 = vpop.f32.mrb[0].mxu0
    %499 = vmatprep.mubr.f32.mxu0 0.0
    %500 = vmatmul.mubr.f32.gmra.mrb[0].mxu0 %v90
    %v501 = vpop.f32.mrb[0].mxu0
    %v502 = vadd.f32 0.0, %v501
    %v503 = vpop.f32.mrb[0].mxu0
    %504 = vmatprep.mubr.f32.mxu0 0.0
    %505 = vmatmul.mubr.f32.gmra.mrb[0].mxu0 %v93
    %v506 = vpop.f32.mrb[0].mxu0
    %v507 = vadd.f32 0.0, %v506
    %v508 = vpop.f32.mrb[0].mxu0
    %509 = vmatprep.mubr.f32.mxu0 0.0
    %510 = vmatmul.mubr.f32.gmra.mrb[0].mxu0 %v96
    %v511 = vpop.f32.mrb[0].mxu0
    %v512 = vadd.f32 0.0, %v511
    %v513 = vpop.f32.mrb[0].mxu0
    %514 = vmatprep.mubr.f32.mxu0 0.0
    %515 = vmatmul.mubr.f32.gmra.mrb[0].mxu0 %v99
    %v516 = vpop.f32.mrb[0].mxu0
    %v517 = vadd.f32 0.0, %v516
    %v518 = vpop.f32.mrb[0].mxu0
    %519 = vmatprep.mubr.f32.mxu0 0.0
    %520 = vmatmul.mubr.f32.gmra.mrb[0].mxu0 %v102
    %v521 = vpop.f32.mrb[0].mxu0
    %v522 = vadd.f32 0.0, %v521
    %v523 = vpop.f32.mrb[0].mxu0
    %524 = vmatprep.mubr.f32.mxu0 0.0
    %525 = vmatmul.mubr.f32.gmra.mrb[0].mxu0 %v105
    %v526 = vpop.f32.mrb[0].mxu0
    %v527 = vadd.f32 0.0, %v526
    %v528 = vpop.f32.mrb[0].mxu0
    %529 = vdwg.mxu0
    %v530 = vadd.f32 %v369, %v452
    %v531 = vadd.f32 %v370, %v457
    %v532 = vadd.f32 %v371, %v462
    %v533 = vadd.f32 %v372, %v467
    %v534 = vadd.f32 %v373, %v472
    %v535 = vadd.f32 %v374, %v477
    %v536 = vadd.f32 %v375, %v482
    %v537 = vadd.f32 %v376, %v487
    %v538 = vadd.f32 %v377, %v492
    %v539 = vadd.f32 %v378, %v497
    %v540 = vadd.f32 %v379, %v502
    %v541 = vadd.f32 %v380, %v507
    %v542 = vadd.f32 %v381, %v512
    %v543 = vadd.f32 %v382, %v517
    %v544 = vadd.f32 %v383, %v522
    %v545 = vadd.f32 %v384, %v527
    %v546 = vxor.u32 %v530, 2147483648
    %v547 = vxor.u32 %v531, 2147483648
    %v548 = vxor.u32 %v532, 2147483648
    %v549 = vxor.u32 %v533, 2147483648
    %v550 = vxor.u32 %v534, 2147483648
    %v551 = vxor.u32 %v535, 2147483648
    %v552 = vxor.u32 %v536, 2147483648
    %v553 = vxor.u32 %v537, 2147483648
    %v554 = vxor.u32 %v542, 2147483648
    %v555 = vxor.u32 %v543, 2147483648
    %v556 = vxor.u32 %v544, 2147483648
    %v557 = vxor.u32 %v545, 2147483648
    %v558 = vmul.f32 %v546, 1.442695
    %v559 = vpow.pop %v558
    %v560 = vmul.f32 %v547, 1.442695
    %v561 = vpow.pop %v560
    %v562 = vmul.f32 %v548, 1.442695
    %v563 = vpow.pop %v562
    %v564 = vmul.f32 %v549, 1.442695
    %v565 = vpow.pop %v564
    %v566 = vmul.f32 %v550, 1.442695
    %v567 = vpow.pop %v566
    %v568 = vmul.f32 %v551, 1.442695
    %v569 = vpow.pop %v568
    %v570 = vmul.f32 %v552, 1.442695
    %v571 = vpow.pop %v570
    %v572 = vmul.f32 %v553, 1.442695
    %v573 = vpow.pop %v572
    %v574 = vmul.f32 %v554, 1.442695
    %v575 = vpow.pop %v574
    %v576 = vmul.f32 %v555, 1.442695
    %v577 = vpow.pop %v576
    %v578 = vmul.f32 %v556, 1.442695
    %v579 = vpow.pop %v578
    %v580 = vmul.f32 %v557, 1.442695
    %v581 = vpow.pop %v580
    %v582 = vadd.f32 %v559, 1.0
    %v583 = vadd.f32 %v561, 1.0
    %v584 = vadd.f32 %v563, 1.0
    %v585 = vadd.f32 %v565, 1.0
    %v586 = vadd.f32 %v567, 1.0
    %v587 = vadd.f32 %v569, 1.0
    %v588 = vadd.f32 %v571, 1.0
    %v589 = vadd.f32 %v573, 1.0
    %v590 = vadd.f32 %v575, 1.0
    %v591 = vadd.f32 %v577, 1.0
    %v592 = vadd.f32 %v579, 1.0
    %v593 = vadd.f32 %v581, 1.0
    %v594 = vrcp.pop %v582
    %v595 = vmul.f32 1.0, %v594
    %v596 = vrcp.pop %v583
    %v597 = vmul.f32 1.0, %v596
    %v598 = vrcp.pop %v584
    %v599 = vmul.f32 1.0, %v598
    %v600 = vrcp.pop %v585
    %v601 = vmul.f32 1.0, %v600
    %v602 = vrcp.pop %v586
    %v603 = vmul.f32 1.0, %v602
    %v604 = vrcp.pop %v587
    %v605 = vmul.f32 1.0, %v604
    %v606 = vrcp.pop %v588
    %v607 = vmul.f32 1.0, %v606
    %v608 = vrcp.pop %v589
    %v609 = vmul.f32 1.0, %v608
    %v610 = vrcp.pop %v590
    %v611 = vmul.f32 1.0, %v610
    %v612 = vrcp.pop %v591
    %v613 = vmul.f32 1.0, %v612
    %v614 = vrcp.pop %v592
    %v615 = vmul.f32 1.0, %v614
    %v616 = vrcp.pop %v593
    %v617 = vmul.f32 1.0, %v616
    %v618 = vtanh.pop %v538
    %v619 = vtanh.pop %v539
    %v620 = vtanh.pop %v540
    %v621 = vtanh.pop %v541
    %v622 = vmul.f32 %v603, %v352
    %v623 = vmul.f32 %v605, %v353
    %v624 = vmul.f32 %v607, %v354
    %v625 = vmul.f32 %v609, %v355
    %v626 = vmul.f32 %v595, %v618
    %v627 = vmul.f32 %v597, %v619
    %v628 = vmul.f32 %v599, %v620
    %v629 = vmul.f32 %v601, %v621
    %v630 = vadd.f32 %v622, %v626
    %v631 = vadd.f32 %v623, %v627
    %v632 = vadd.f32 %v624, %v628
    %v633 = vadd.f32 %v625, %v629
    %v634 = vtanh.pop %v630
    %v635 = vtanh.pop %v631
    %v636 = vtanh.pop %v632
    %v637 = vtanh.pop %v633
    %v638 = vmul.f32 %v611, %v634
    %v639 = vmul.f32 %v613, %v635
    %v640 = vmul.f32 %v615, %v636
    %v641 = vmul.f32 %v617, %v637
    %s642 = scalar_lea.vmem [#allocation5], 32
    %643 = vst [vmem:[%s642] sm:$0xff] %v638
    %644 = vst [vmem:[%s642 + $0x8] sm:$0xff] %v639
    %645 = vst [vmem:[%s642 + $0x10] sm:$0xff] %v640
    %646 = vst [vmem:[%s642 + $0x18] sm:$0xff] %v641
    %s647 = scalar_lea.vmem [#allocation2], 256
    %v648 = vld [vmem:[%s647] sm:$0xff]
    %v649 = vld [vmem:[%s647 + $0x8] sm:$0xff]
    %v650 = vld [vmem:[%s647 + $0x10] sm:$0xff]
    %v651 = vld [vmem:[%s647 + $0x18] sm:$0xff]
    %v652 = vld [vmem:[%s647 + $0x20] sm:$0xff]
    %v653 = vld [vmem:[%s647 + $0x28] sm:$0xff]
    %v654 = vld [vmem:[%s647 + $0x30] sm:$0xff]
    %v655 = vld [vmem:[%s647 + $0x38] sm:$0xff]
    %v656 = vld [vmem:[%s647 + $0x40] sm:$0xff]
    %v657 = vld [vmem:[%s647 + $0x48] sm:$0xff]
    %v658 = vld [vmem:[%s647 + $0x50] sm:$0xff]
    %v659 = vld [vmem:[%s647 + $0x58] sm:$0xff]
    %v660 = vld [vmem:[%s647 + $0x60] sm:$0xff]
    %v661 = vld [vmem:[%s647 + $0x68] sm:$0xff]
    %v662 = vld [vmem:[%s647 + $0x70] sm:$0xff]
    %v663 = vld [vmem:[%s647 + $0x78] sm:$0xff]
    %664 = vmatprep.subr.mxu0 0.0
    %665 = vmatpush1.msra.mxu0 %v638
    %666 = vmatprep.subr.mxu0 0.0
    %667 = vmatpush1.msra.mxu0 %v639
    %668 = vmatprep.subr.mxu0 0.0
    %669 = vmatpush1.msra.mxu0 %v640
    %670 = vmatprep.subr.mxu0 0.0
    %671 = vmatpush1.msra.mxu0 %v641
    %672 = vmatprep.subr.mxu0 0.0
    %673 = vmatpush1.msra.mxu0 0.0
    %674 = vmatprep.subr.mxu0 0.0
    %675 = vmatpush1.msra.mxu0 0.0
    %676 = vmatprep.subr.mxu0 0.0
    %677 = vmatpush1.msra.mxu0 0.0
    %678 = vmatprep.subr.mxu0 0.0
    %679 = vmatpush1.msra.mxu0 0.0
    %680 = vmatprep.subr.mxu0 0.0
    %681 = vmatpush1.msra.mxu0 0.0
    %682 = vmatprep.subr.mxu0 0.0
    %683 = vmatpush1.msra.mxu0 0.0
    %684 = vmatprep.subr.mxu0 0.0
    %685 = vmatpush1.msra.mxu0 0.0
    %686 = vmatprep.subr.mxu0 0.0
    %687 = vmatpush1.msra.mxu0 0.0
    %688 = vmatprep.subr.mxu0 0.0
    %689 = vmatpush1.msra.mxu0 0.0
    %690 = vmatprep.subr.mxu0 0.0
    %691 = vmatpush1.msra.mxu0 0.0
    %692 = vmatprep.subr.mxu0 0.0
    %693 = vmatpush1.msra.mxu0 0.0
    %694 = vmatprep.subr.mxu0 0.0
    %695 = vmatpush1.msra.mxu0 0.0
    %696 = vmatprep.subr.mxu0 0.0
    %697 = vmatpush1.msra.mxu0 0.0
    %698 = vmatprep.subr.mxu0 0.0
    %699 = vmatpush1.msra.mxu0 0.0
    %700 = vmatprep.subr.mxu0 0.0
    %701 = vmatpush1.msra.mxu0 0.0
    %702 = vmatprep.subr.mxu0 0.0
    %703 = vmatpush1.msra.mxu0 0.0
    %704 = vmatprep.subr.mxu0 0.0
    %705 = vmatpush1.msra.mxu0 0.0
    %706 = vmatprep.subr.mxu0 0.0
    %707 = vmatpush1.msra.mxu0 0.0
    %708 = vmatprep.subr.mxu0 0.0
    %709 = vmatpush1.msra.mxu0 0.0
    %710 = vmatprep.subr.mxu0 0.0
    %711 = vmatpush1.msra.mxu0 0.0
    %712 = vmatprep.subr.mxu0 0.0
    %713 = vmatpush1.msra.mxu0 0.0
    %714 = vmatprep.subr.mxu0 0.0
    %715 = vmatpush1.msra.mxu0 0.0
    %716 = vmatprep.subr.mxu0 0.0
    %717 = vmatpush1.msra.mxu0 0.0
    %718 = vmatprep.subr.mxu0 0.0
    %719 = vmatpush1.msra.mxu0 0.0
    %720 = vmatprep.subr.mxu0 0.0
    %721 = vmatpush1.msra.mxu0 0.0
    %722 = vmatprep.subr.mxu0 0.0
    %723 = vmatpush1.msra.mxu0 0.0
    %724 = vmatprep.subr.mxu0 0.0
    %725 = vmatpush1.msra.mxu0 0.0
    %726 = vmatprep.subr.mxu0 0.0
    %727 = vmatpush1.msra.mxu0 0.0
    %728 = vmatprep.mubr.f32.mxu0 0.0
    %729 = vmatmul.mubr.f32.gmra.mrb[0].mxu0 %v60
    %v730 = vpop.f32.mrb[0].mxu0
    %v731 = vadd.f32 0.0, %v730
    %v732 = vpop.f32.mrb[0].mxu0
    %733 = vmatprep.mubr.f32.mxu0 0.0
    %734 = vmatmul.mubr.f32.gmra.mrb[0].mxu0 %v63
    %v735 = vpop.f32.mrb[0].mxu0
    %v736 = vadd.f32 0.0, %v735
    %v737 = vpop.f32.mrb[0].mxu0
    %738 = vmatprep.mubr.f32.mxu0 0.0
    %739 = vmatmul.mubr.f32.gmra.mrb[0].mxu0 %v66
    %v740 = vpop.f32.mrb[0].mxu0
    %v741 = vadd.f32 0.0, %v740
    %v742 = vpop.f32.mrb[0].mxu0
    %743 = vmatprep.mubr.f32.mxu0 0.0
    %744 = vmatmul.mubr.f32.gmra.mrb[0].mxu0 %v69
    %v745 = vpop.f32.mrb[0].mxu0
    %v746 = vadd.f32 0.0, %v745
    %v747 = vpop.f32.mrb[0].mxu0
    %748 = vmatprep.mubr.f32.mxu0 0.0
    %749 = vmatmul.mubr.f32.gmra.mrb[0].mxu0 %v72
    %v750 = vpop.f32.mrb[0].mxu0
    %v751 = vadd.f32 0.0, %v750
    %v752 = vpop.f32.mrb[0].mxu0
    %753 = vmatprep.mubr.f32.mxu0 0.0
    %754 = vmatmul.mubr.f32.gmra.mrb[0].mxu0 %v75
    %v755 = vpop.f32.mrb[0].mxu0
    %v756 = vadd.f32 0.0, %v755
    %v757 = vpop.f32.mrb[0].mxu0
    %758 = vmatprep.mubr.f32.mxu0 0.0
    %759 = vmatmul.mubr.f32.gmra.mrb[0].mxu0 %v78
    %v760 = vpop.f32.mrb[0].mxu0
    %v761 = vadd.f32 0.0, %v760
    %v762 = vpop.f32.mrb[0].mxu0
    %763 = vmatprep.mubr.f32.mxu0 0.0
    %764 = vmatmul.mubr.f32.gmra.mrb[0].mxu0 %v81
    %v765 = vpop.f32.mrb[0].mxu0
    %v766 = vadd.f32 0.0, %v765
    %v767 = vpop.f32.mrb[0].mxu0
    %768 = vmatprep.mubr.f32.mxu0 0.0
    %769 = vmatmul.mubr.f32.gmra.mrb[0].mxu0 %v84
    %v770 = vpop.f32.mrb[0].mxu0
    %v771 = vadd.f32 0.0, %v770
    %v772 = vpop.f32.mrb[0].mxu0
    %773 = vmatprep.mubr.f32.mxu0 0.0
    %774 = vmatmul.mubr.f32.gmra.mrb[0].mxu0 %v87
    %v775 = vpop.f32.mrb[0].mxu0
    %v776 = vadd.f32 0.0, %v775
    %v777 = vpop.f32.mrb[0].mxu0
    %778 = vmatprep.mubr.f32.mxu0 0.0
    %779 = vmatmul.mubr.f32.gmra.mrb[0].mxu0 %v90
    %v780 = vpop.f32.mrb[0].mxu0
    %v781 = vadd.f32 0.0, %v780
    %v782 = vpop.f32.mrb[0].mxu0
    %783 = vmatprep.mubr.f32.mxu0 0.0
    %784 = vmatmul.mubr.f32.gmra.mrb[0].mxu0 %v93
    %v785 = vpop.f32.mrb[0].mxu0
    %v786 = vadd.f32 0.0, %v785
    %v787 = vpop.f32.mrb[0].mxu0
    %788 = vmatprep.mubr.f32.mxu0 0.0
    %789 = vmatmul.mubr.f32.gmra.mrb[0].mxu0 %v96
    %v790 = vpop.f32.mrb[0].mxu0
    %v791 = vadd.f32 0.0, %v790
    %v792 = vpop.f32.mrb[0].mxu0
    %793 = vmatprep.mubr.f32.mxu0 0.0
    %794 = vmatmul.mubr.f32.gmra.mrb[0].mxu0 %v99
    %v795 = vpop.f32.mrb[0].mxu0
    %v796 = vadd.f32 0.0, %v795
    %v797 = vpop.f32.mrb[0].mxu0
    %798 = vmatprep.mubr.f32.mxu0 0.0
    %799 = vmatmul.mubr.f32.gmra.mrb[0].mxu0 %v102
    %v800 = vpop.f32.mrb[0].mxu0
    %v801 = vadd.f32 0.0, %v800
    %v802 = vpop.f32.mrb[0].mxu0
    %803 = vmatprep.mubr.f32.mxu0 0.0
    %804 = vmatmul.mubr.f32.gmra.mrb[0].mxu0 %v105
    %v805 = vpop.f32.mrb[0].mxu0
    %v806 = vadd.f32 0.0, %v805
    %v807 = vpop.f32.mrb[0].mxu0
    %808 = vdwg.mxu0
    %v809 = vadd.f32 %v648, %v731
    %v810 = vadd.f32 %v649, %v736
    %v811 = vadd.f32 %v650, %v741
    %v812 = vadd.f32 %v651, %v746
    %v813 = vadd.f32 %v652, %v751
    %v814 = vadd.f32 %v653, %v756
    %v815 = vadd.f32 %v654, %v761
    %v816 = vadd.f32 %v655, %v766
    %v817 = vadd.f32 %v656, %v771
    %v818 = vadd.f32 %v657, %v776
    %v819 = vadd.f32 %v658, %v781
    %v820 = vadd.f32 %v659, %v786
    %v821 = vadd.f32 %v660, %v791
    %v822 = vadd.f32 %v661, %v796
    %v823 = vadd.f32 %v662, %v801
    %v824 = vadd.f32 %v663, %v806
    %v825 = vxor.u32 %v809, 2147483648
    %v826 = vxor.u32 %v810, 2147483648
    %v827 = vxor.u32 %v811, 2147483648
    %v828 = vxor.u32 %v812, 2147483648
    %v829 = vxor.u32 %v813, 2147483648
    %v830 = vxor.u32 %v814, 2147483648
    %v831 = vxor.u32 %v815, 2147483648
    %v832 = vxor.u32 %v816, 2147483648
    %v833 = vxor.u32 %v821, 2147483648
    %v834 = vxor.u32 %v822, 2147483648
    %v835 = vxor.u32 %v823, 2147483648
    %v836 = vxor.u32 %v824, 2147483648
    %v837 = vmul.f32 %v825, 1.442695
    %v838 = vpow.pop %v837
    %v839 = vmul.f32 %v826, 1.442695
    %v840 = vpow.pop %v839
    %v841 = vmul.f32 %v827, 1.442695
    %v842 = vpow.pop %v841
    %v843 = vmul.f32 %v828, 1.442695
    %v844 = vpow.pop %v843
    %v845 = vmul.f32 %v829, 1.442695
    %v846 = vpow.pop %v845
    %v847 = vmul.f32 %v830, 1.442695
    %v848 = vpow.pop %v847
    %v849 = vmul.f32 %v831, 1.442695
    %v850 = vpow.pop %v849
    %v851 = vmul.f32 %v832, 1.442695
    %v852 = vpow.pop %v851
    %v853 = vmul.f32 %v833, 1.442695
    %v854 = vpow.pop %v853
    %v855 = vmul.f32 %v834, 1.442695
    %v856 = vpow.pop %v855
    %v857 = vmul.f32 %v835, 1.442695
    %v858 = vpow.pop %v857
    %v859 = vmul.f32 %v836, 1.442695
    %v860 = vpow.pop %v859
    %v861 = vadd.f32 %v838, 1.0
    %v862 = vadd.f32 %v840, 1.0
    %v863 = vadd.f32 %v842, 1.0
    %v864 = vadd.f32 %v844, 1.0
    %v865 = vadd.f32 %v846, 1.0
    %v866 = vadd.f32 %v848, 1.0
    %v867 = vadd.f32 %v850, 1.0
    %v868 = vadd.f32 %v852, 1.0
    %v869 = vadd.f32 %v854, 1.0
    %v870 = vadd.f32 %v856, 1.0
    %v871 = vadd.f32 %v858, 1.0
    %v872 = vadd.f32 %v860, 1.0
    %v873 = vrcp.pop %v861
    %v874 = vmul.f32 1.0, %v873
    %v875 = vrcp.pop %v862
    %v876 = vmul.f32 1.0, %v875
    %v877 = vrcp.pop %v863
    %v878 = vmul.f32 1.0, %v877
    %v879 = vrcp.pop %v864
    %v880 = vmul.f32 1.0, %v879
    %v881 = vrcp.pop %v865
    %v882 = vmul.f32 1.0, %v881
    %v883 = vrcp.pop %v866
    %v884 = vmul.f32 1.0, %v883
    %v885 = vrcp.pop %v867
    %v886 = vmul.f32 1.0, %v885
    %v887 = vrcp.pop %v868
    %v888 = vmul.f32 1.0, %v887
    %v889 = vrcp.pop %v869
    %v890 = vmul.f32 1.0, %v889
    %v891 = vrcp.pop %v870
    %v892 = vmul.f32 1.0, %v891
    %v893 = vrcp.pop %v871
    %v894 = vmul.f32 1.0, %v893
    %v895 = vrcp.pop %v872
    %v896 = vmul.f32 1.0, %v895
    %v897 = vtanh.pop %v817
    %v898 = vtanh.pop %v818
    %v899 = vtanh.pop %v819
    %v900 = vtanh.pop %v820
    %v901 = vmul.f32 %v882, %v630
    %v902 = vmul.f32 %v884, %v631
    %v903 = vmul.f32 %v886, %v632
    %v904 = vmul.f32 %v888, %v633
    %v905 = vmul.f32 %v874, %v897
    %v906 = vmul.f32 %v876, %v898
    %v907 = vmul.f32 %v878, %v899
    %v908 = vmul.f32 %v880, %v900
    %v909 = vadd.f32 %v901, %v905
    %v910 = vadd.f32 %v902, %v906
    %v911 = vadd.f32 %v903, %v907
    %v912 = vadd.f32 %v904, %v908
    %v913 = vtanh.pop %v909
    %v914 = vtanh.pop %v910
    %v915 = vtanh.pop %v911
    %v916 = vtanh.pop %v912
    %v917 = vmul.f32 %v890, %v913
    %v918 = vmul.f32 %v892, %v914
    %v919 = vmul.f32 %v894, %v915
    %v920 = vmul.f32 %v896, %v916
    %s921 = scalar_lea.vmem [#allocation5], 64
    %922 = vst [vmem:[%s921] sm:$0xff] %v917
    %923 = vst [vmem:[%s921 + $0x8] sm:$0xff] %v918
    %924 = vst [vmem:[%s921 + $0x10] sm:$0xff] %v919
    %925 = vst [vmem:[%s921 + $0x18] sm:$0xff] %v920
    %s926 = scalar_lea.vmem [#allocation2], 384
    %v927 = vld [vmem:[%s926] sm:$0xff]
    %v928 = vld [vmem:[%s926 + $0x8] sm:$0xff]
    %v929 = vld [vmem:[%s926 + $0x10] sm:$0xff]
    %v930 = vld [vmem:[%s926 + $0x18] sm:$0xff]
    %v931 = vld [vmem:[%s926 + $0x20] sm:$0xff]
    %v932 = vld [vmem:[%s926 + $0x28] sm:$0xff]
    %v933 = vld [vmem:[%s926 + $0x30] sm:$0xff]
    %v934 = vld [vmem:[%s926 + $0x38] sm:$0xff]
    %v935 = vld [vmem:[%s926 + $0x40] sm:$0xff]
    %v936 = vld [vmem:[%s926 + $0x48] sm:$0xff]
    %v937 = vld [vmem:[%s926 + $0x50] sm:$0xff]
    %v938 = vld [vmem:[%s926 + $0x58] sm:$0xff]
    %v939 = vld [vmem:[%s926 + $0x60] sm:$0xff]
    %v940 = vld [vmem:[%s926 + $0x68] sm:$0xff]
    %v941 = vld [vmem:[%s926 + $0x70] sm:$0xff]
    %v942 = vld [vmem:[%s926 + $0x78] sm:$0xff]
    %943 = vmatprep.subr.mxu0 0.0
    %944 = vmatpush1.msra.mxu0 %v917
    %945 = vmatprep.subr.mxu0 0.0
    %946 = vmatpush1.msra.mxu0 %v918
    %947 = vmatprep.subr.mxu0 0.0
    %948 = vmatpush1.msra.mxu0 %v919
    %949 = vmatprep.subr.mxu0 0.0
    %950 = vmatpush1.msra.mxu0 %v920
    %951 = vmatprep.subr.mxu0 0.0
    %952 = vmatpush1.msra.mxu0 0.0
    %953 = vmatprep.subr.mxu0 0.0
    %954 = vmatpush1.msra.mxu0 0.0
    %955 = vmatprep.subr.mxu0 0.0
    %956 = vmatpush1.msra.mxu0 0.0
    %957 = vmatprep.subr.mxu0 0.0
    %958 = vmatpush1.msra.mxu0 0.0
    %959 = vmatprep.subr.mxu0 0.0
    %960 = vmatpush1.msra.mxu0 0.0
    %961 = vmatprep.subr.mxu0 0.0
    %962 = vmatpush1.msra.mxu0 0.0
    %963 = vmatprep.subr.mxu0 0.0
    %964 = vmatpush1.msra.mxu0 0.0
    %965 = vmatprep.subr.mxu0 0.0
    %966 = vmatpush1.msra.mxu0 0.0
    %967 = vmatprep.subr.mxu0 0.0
    %968 = vmatpush1.msra.mxu0 0.0
    %969 = vmatprep.subr.mxu0 0.0
    %970 = vmatpush1.msra.mxu0 0.0
    %971 = vmatprep.subr.mxu0 0.0
    %972 = vmatpush1.msra.mxu0 0.0
    %973 = vmatprep.subr.mxu0 0.0
    %974 = vmatpush1.msra.mxu0 0.0
    %975 = vmatprep.subr.mxu0 0.0
    %976 = vmatpush1.msra.mxu0 0.0
    %977 = vmatprep.subr.mxu0 0.0
    %978 = vmatpush1.msra.mxu0 0.0
    %979 = vmatprep.subr.mxu0 0.0
    %980 = vmatpush1.msra.mxu0 0.0
    %981 = vmatprep.subr.mxu0 0.0
    %982 = vmatpush1.msra.mxu0 0.0
    %983 = vmatprep.subr.mxu0 0.0
    %984 = vmatpush1.msra.mxu0 0.0
    %985 = vmatprep.subr.mxu0 0.0
    %986 = vmatpush1.msra.mxu0 0.0
    %987 = vmatprep.subr.mxu0 0.0
    %988 = vmatpush1.msra.mxu0 0.0
    %989 = vmatprep.subr.mxu0 0.0
    %990 = vmatpush1.msra.mxu0 0.0
    %991 = vmatprep.subr.mxu0 0.0
    %992 = vmatpush1.msra.mxu0 0.0
    %993 = vmatprep.subr.mxu0 0.0
    %994 = vmatpush1.msra.mxu0 0.0
    %995 = vmatprep.subr.mxu0 0.0
    %996 = vmatpush1.msra.mxu0 0.0
    %997 = vmatprep.subr.mxu0 0.0
    %998 = vmatpush1.msra.mxu0 0.0
    %999 = vmatprep.subr.mxu0 0.0
    %1000 = vmatpush1.msra.mxu0 0.0
    %1001 = vmatprep.subr.mxu0 0.0
    %1002 = vmatpush1.msra.mxu0 0.0
    %1003 = vmatprep.subr.mxu0 0.0
    %1004 = vmatpush1.msra.mxu0 0.0
    %1005 = vmatprep.subr.mxu0 0.0
    %1006 = vmatpush1.msra.mxu0 0.0
    %1007 = vmatprep.mubr.f32.mxu0 0.0
    %1008 = vmatmul.mubr.f32.gmra.mrb[0].mxu0 %v60
    %v1009 = vpop.f32.mrb[0].mxu0
    %v1010 = vadd.f32 0.0, %v1009
    %v1011 = vpop.f32.mrb[0].mxu0
    %1012 = vmatprep.mubr.f32.mxu0 0.0
    %1013 = vmatmul.mubr.f32.gmra.mrb[0].mxu0 %v63
    %v1014 = vpop.f32.mrb[0].mxu0
    %v1015 = vadd.f32 0.0, %v1014
    %v1016 = vpop.f32.mrb[0].mxu0
    %1017 = vmatprep.mubr.f32.mxu0 0.0
    %1018 = vmatmul.mubr.f32.gmra.mrb[0].mxu0 %v66
    %v1019 = vpop.f32.mrb[0].mxu0
    %v1020 = vadd.f32 0.0, %v1019
    %v1021 = vpop.f32.mrb[0].mxu0
    %1022 = vmatprep.mubr.f32.mxu0 0.0
    %1023 = vmatmul.mubr.f32.gmra.mrb[0].mxu0 %v69
    %v1024 = vpop.f32.mrb[0].mxu0
    %v1025 = vadd.f32 0.0, %v1024
    %v1026 = vpop.f32.mrb[0].mxu0
    %1027 = vmatprep.mubr.f32.mxu0 0.0
    %1028 = vmatmul.mubr.f32.gmra.mrb[0].mxu0 %v72
    %v1029 = vpop.f32.mrb[0].mxu0
    %v1030 = vadd.f32 0.0, %v1029
    %v1031 = vpop.f32.mrb[0].mxu0
    %1032 = vmatprep.mubr.f32.mxu0 0.0
    %1033 = vmatmul.mubr.f32.gmra.mrb[0].mxu0 %v75
    %v1034 = vpop.f32.mrb[0].mxu0
    %v1035 = vadd.f32 0.0, %v1034
    %v1036 = vpop.f32.mrb[0].mxu0
    %1037 = vmatprep.mubr.f32.mxu0 0.0
    %1038 = vmatmul.mubr.f32.gmra.mrb[0].mxu0 %v78
    %v1039 = vpop.f32.mrb[0].mxu0
    %v1040 = vadd.f32 0.0, %v1039
    %v1041 = vpop.f32.mrb[0].mxu0
    %1042 = vmatprep.mubr.f32.mxu0 0.0
    %1043 = vmatmul.mubr.f32.gmra.mrb[0].mxu0 %v81
    %v1044 = vpop.f32.mrb[0].mxu0
    %v1045 = vadd.f32 0.0, %v1044
    %v1046 = vpop.f32.mrb[0].mxu0
    %1047 = vmatprep.mubr.f32.mxu0 0.0
    %1048 = vmatmul.mubr.f32.gmra.mrb[0].mxu0 %v84
    %v1049 = vpop.f32.mrb[0].mxu0
    %v1050 = vadd.f32 0.0, %v1049
    %v1051 = vpop.f32.mrb[0].mxu0
    %1052 = vmatprep.mubr.f32.mxu0 0.0
    %1053 = vmatmul.mubr.f32.gmra.mrb[0].mxu0 %v87
    %v1054 = vpop.f32.mrb[0].mxu0
    %v1055 = vadd.f32 0.0, %v1054
    %v1056 = vpop.f32.mrb[0].mxu0
    %1057 = vmatprep.mubr.f32.mxu0 0.0
    %1058 = vmatmul.mubr.f32.gmra.mrb[0].mxu0 %v90
    %v1059 = vpop.f32.mrb[0].mxu0
    %v1060 = vadd.f32 0.0, %v1059
    %v1061 = vpop.f32.mrb[0].mxu0
    %1062 = vmatprep.mubr.f32.mxu0 0.0
    %1063 = vmatmul.mubr.f32.gmra.mrb[0].mxu0 %v93
    %v1064 = vpop.f32.mrb[0].mxu0
    %v1065 = vadd.f32 0.0, %v1064
    %v1066 = vpop.f32.mrb[0].mxu0
    %1067 = vmatprep.mubr.f32.mxu0 0.0
    %1068 = vmatmul.mubr.f32.gmra.mrb[0].mxu0 %v96
    %v1069 = vpop.f32.mrb[0].mxu0
    %v1070 = vadd.f32 0.0, %v1069
    %v1071 = vpop.f32.mrb[0].mxu0
    %1072 = vmatprep.mubr.f32.mxu0 0.0
    %1073 = vmatmul.mubr.f32.gmra.mrb[0].mxu0 %v99
    %v1074 = vpop.f32.mrb[0].mxu0
    %v1075 = vadd.f32 0.0, %v1074
    %v1076 = vpop.f32.mrb[0].mxu0
    %1077 = vmatprep.mubr.f32.mxu0 0.0
    %1078 = vmatmul.mubr.f32.gmra.mrb[0].mxu0 %v102
    %v1079 = vpop.f32.mrb[0].mxu0
    %v1080 = vadd.f32 0.0, %v1079
    %v1081 = vpop.f32.mrb[0].mxu0
    %1082 = vmatprep.mubr.f32.mxu0 0.0
    %1083 = vmatmul.mubr.f32.gmra.mrb[0].mxu0 %v105
    %v1084 = vpop.f32.mrb[0].mxu0
    %v1085 = vadd.f32 0.0, %v1084
    %v1086 = vpop.f32.mrb[0].mxu0
    %1087 = vdwg.mxu0
    %v1088 = vadd.f32 %v927, %v1010
    %v1089 = vadd.f32 %v928, %v1015
    %v1090 = vadd.f32 %v929, %v1020
    %v1091 = vadd.f32 %v930, %v1025
    %v1092 = vadd.f32 %v931, %v1030
    %v1093 = vadd.f32 %v932, %v1035
    %v1094 = vadd.f32 %v933, %v1040
    %v1095 = vadd.f32 %v934, %v1045
    %v1096 = vadd.f32 %v935, %v1050
    %v1097 = vadd.f32 %v936, %v1055
    %v1098 = vadd.f32 %v937, %v1060
    %v1099 = vadd.f32 %v938, %v1065
    %v1100 = vadd.f32 %v939, %v1070
    %v1101 = vadd.f32 %v940, %v1075
    %v1102 = vadd.f32 %v941, %v1080
    %v1103 = vadd.f32 %v942, %v1085
    %v1104 = vxor.u32 %v1088, 2147483648
    %v1105 = vxor.u32 %v1089, 2147483648
    %v1106 = vxor.u32 %v1090, 2147483648
    %v1107 = vxor.u32 %v1091, 2147483648
    %v1108 = vxor.u32 %v1092, 2147483648
    %v1109 = vxor.u32 %v1093, 2147483648
    %v1110 = vxor.u32 %v1094, 2147483648
    %v1111 = vxor.u32 %v1095, 2147483648
    %v1112 = vxor.u32 %v1100, 2147483648
    %v1113 = vxor.u32 %v1101, 2147483648
    %v1114 = vxor.u32 %v1102, 2147483648
    %v1115 = vxor.u32 %v1103, 2147483648
    %v1116 = vmul.f32 %v1104, 1.442695
    %v1117 = vpow.pop %v1116
    %v1118 = vmul.f32 %v1105, 1.442695
    %v1119 = vpow.pop %v1118
    %v1120 = vmul.f32 %v1106, 1.442695
    %v1121 = vpow.pop %v1120
    %v1122 = vmul.f32 %v1107, 1.442695
    %v1123 = vpow.pop %v1122
    %v1124 = vmul.f32 %v1108, 1.442695
    %v1125 = vpow.pop %v1124
    %v1126 = vmul.f32 %v1109, 1.442695
    %v1127 = vpow.pop %v1126
    %v1128 = vmul.f32 %v1110, 1.442695
    %v1129 = vpow.pop %v1128
    %v1130 = vmul.f32 %v1111, 1.442695
    %v1131 = vpow.pop %v1130
    %v1132 = vmul.f32 %v1112, 1.442695
    %v1133 = vpow.pop %v1132
    %v1134 = vmul.f32 %v1113, 1.442695
    %v1135 = vpow.pop %v1134
    %v1136 = vmul.f32 %v1114, 1.442695
    %v1137 = vpow.pop %v1136
    %v1138 = vmul.f32 %v1115, 1.442695
    %v1139 = vpow.pop %v1138
    %v1140 = vadd.f32 %v1117, 1.0
    %v1141 = vadd.f32 %v1119, 1.0
    %v1142 = vadd.f32 %v1121, 1.0
    %v1143 = vadd.f32 %v1123, 1.0
    %v1144 = vadd.f32 %v1125, 1.0
    %v1145 = vadd.f32 %v1127, 1.0
    %v1146 = vadd.f32 %v1129, 1.0
    %v1147 = vadd.f32 %v1131, 1.0
    %v1148 = vadd.f32 %v1133, 1.0
    %v1149 = vadd.f32 %v1135, 1.0
    %v1150 = vadd.f32 %v1137, 1.0
    %v1151 = vadd.f32 %v1139, 1.0
    %v1152 = vrcp.pop %v1140
    %v1153 = vmul.f32 1.0, %v1152
    %v1154 = vrcp.pop %v1141
    %v1155 = vmul.f32 1.0, %v1154
    %v1156 = vrcp.pop %v1142
    %v1157 = vmul.f32 1.0, %v1156
    %v1158 = vrcp.pop %v1143
    %v1159 = vmul.f32 1.0, %v1158
    %v1160 = vrcp.pop %v1144
    %v1161 = vmul.f32 1.0, %v1160
    %v1162 = vrcp.pop %v1145
    %v1163 = vmul.f32 1.0, %v1162
    %v1164 = vrcp.pop %v1146
    %v1165 = vmul.f32 1.0, %v1164
    %v1166 = vrcp.pop %v1147
    %v1167 = vmul.f32 1.0, %v1166
    %v1168 = vrcp.pop %v1148
    %v1169 = vmul.f32 1.0, %v1168
    %v1170 = vrcp.pop %v1149
    %v1171 = vmul.f32 1.0, %v1170
    %v1172 = vrcp.pop %v1150
    %v1173 = vmul.f32 1.0, %v1172
    %v1174 = vrcp.pop %v1151
    %v1175 = vmul.f32 1.0, %v1174
    %v1176 = vtanh.pop %v1096
    %v1177 = vtanh.pop %v1097
    %v1178 = vtanh.pop %v1098
    %v1179 = vtanh.pop %v1099
    %v1180 = vmul.f32 %v1161, %v909
    %v1181 = vmul.f32 %v1163, %v910
    %v1182 = vmul.f32 %v1165, %v911
    %v1183 = vmul.f32 %v1167, %v912
    %v1184 = vmul.f32 %v1153, %v1176
    %v1185 = vmul.f32 %v1155, %v1177
    %v1186 = vmul.f32 %v1157, %v1178
    %v1187 = vmul.f32 %v1159, %v1179
    %v1188 = vadd.f32 %v1180, %v1184
    %v1189 = vadd.f32 %v1181, %v1185
    %v1190 = vadd.f32 %v1182, %v1186
    %v1191 = vadd.f32 %v1183, %v1187
    %v1192 = vtanh.pop %v1188
    %v1193 = vtanh.pop %v1189
    %v1194 = vtanh.pop %v1190
    %v1195 = vtanh.pop %v1191
    %v1196 = vmul.f32 %v1169, %v1192
    %v1197 = vmul.f32 %v1171, %v1193
    %v1198 = vmul.f32 %v1173, %v1194
    %v1199 = vmul.f32 %v1175, %v1195
    %s1200 = scalar_lea.vmem [#allocation5], 96
    %1201 = vst [vmem:[%s1200] sm:$0xff] %v1196
    %1202 = vst [vmem:[%s1200 + $0x8] sm:$0xff] %v1197
    %1203 = vst [vmem:[%s1200 + $0x10] sm:$0xff] %v1198
    %1204 = vst [vmem:[%s1200 + $0x18] sm:$0xff] %v1199
    %s1205 = scalar_lea.vmem [#allocation2], 512
    %v1206 = vld [vmem:[%s1205] sm:$0xff]
    %v1207 = vld [vmem:[%s1205 + $0x8] sm:$0xff]
    %v1208 = vld [vmem:[%s1205 + $0x10] sm:$0xff]
    %v1209 = vld [vmem:[%s1205 + $0x18] sm:$0xff]
    %v1210 = vld [vmem:[%s1205 + $0x20] sm:$0xff]
    %v1211 = vld [vmem:[%s1205 + $0x28] sm:$0xff]
    %v1212 = vld [vmem:[%s1205 + $0x30] sm:$0xff]
    %v1213 = vld [vmem:[%s1205 + $0x38] sm:$0xff]
    %v1214 = vld [vmem:[%s1205 + $0x40] sm:$0xff]
    %v1215 = vld [vmem:[%s1205 + $0x48] sm:$0xff]
    %v1216 = vld [vmem:[%s1205 + $0x50] sm:$0xff]
    %v1217 = vld [vmem:[%s1205 + $0x58] sm:$0xff]
    %v1218 = vld [vmem:[%s1205 + $0x60] sm:$0xff]
    %v1219 = vld [vmem:[%s1205 + $0x68] sm:$0xff]
    %v1220 = vld [vmem:[%s1205 + $0x70] sm:$0xff]
    %v1221 = vld [vmem:[%s1205 + $0x78] sm:$0xff]
    %1222 = vmatprep.subr.mxu0 0.0
    %1223 = vmatpush1.msra.mxu0 %v1196
    %1224 = vmatprep.subr.mxu0 0.0
    %1225 = vmatpush1.msra.mxu0 %v1197
    %1226 = vmatprep.subr.mxu0 0.0
    %1227 = vmatpush1.msra.mxu0 %v1198
    %1228 = vmatprep.subr.mxu0 0.0
    %1229 = vmatpush1.msra.mxu0 %v1199
    %1230 = vmatprep.subr.mxu0 0.0
    %1231 = vmatpush1.msra.mxu0 0.0
    %1232 = vmatprep.subr.mxu0 0.0
    %1233 = vmatpush1.msra.mxu0 0.0
    %1234 = vmatprep.subr.mxu0 0.0
    %1235 = vmatpush1.msra.mxu0 0.0
    %1236 = vmatprep.subr.mxu0 0.0
    %1237 = vmatpush1.msra.mxu0 0.0
    %1238 = vmatprep.subr.mxu0 0.0
    %1239 = vmatpush1.msra.mxu0 0.0
    %1240 = vmatprep.subr.mxu0 0.0
    %1241 = vmatpush1.msra.mxu0 0.0
    %1242 = vmatprep.subr.mxu0 0.0
    %1243 = vmatpush1.msra.mxu0 0.0
    %1244 = vmatprep.subr.mxu0 0.0
    %1245 = vmatpush1.msra.mxu0 0.0
    %1246 = vmatprep.subr.mxu0 0.0
    %1247 = vmatpush1.msra.mxu0 0.0
    %1248 = vmatprep.subr.mxu0 0.0
    %1249 = vmatpush1.msra.mxu0 0.0
    %1250 = vmatprep.subr.mxu0 0.0
    %1251 = vmatpush1.msra.mxu0 0.0
    %1252 = vmatprep.subr.mxu0 0.0
    %1253 = vmatpush1.msra.mxu0 0.0
    %1254 = vmatprep.subr.mxu0 0.0
    %1255 = vmatpush1.msra.mxu0 0.0
    %1256 = vmatprep.subr.mxu0 0.0
    %1257 = vmatpush1.msra.mxu0 0.0
    %1258 = vmatprep.subr.mxu0 0.0
    %1259 = vmatpush1.msra.mxu0 0.0
    %1260 = vmatprep.subr.mxu0 0.0
    %1261 = vmatpush1.msra.mxu0 0.0
    %1262 = vmatprep.subr.mxu0 0.0
    %1263 = vmatpush1.msra.mxu0 0.0
    %1264 = vmatprep.subr.mxu0 0.0
    %1265 = vmatpush1.msra.mxu0 0.0
    %1266 = vmatprep.subr.mxu0 0.0
    %1267 = vmatpush1.msra.mxu0 0.0
    %1268 = vmatprep.subr.mxu0 0.0
    %1269 = vmatpush1.msra.mxu0 0.0
    %1270 = vmatprep.subr.mxu0 0.0
    %1271 = vmatpush1.msra.mxu0 0.0
    %1272 = vmatprep.subr.mxu0 0.0
    %1273 = vmatpush1.msra.mxu0 0.0
    %1274 = vmatprep.subr.mxu0 0.0
    %1275 = vmatpush1.msra.mxu0 0.0
    %1276 = vmatprep.subr.mxu0 0.0
    %1277 = vmatpush1.msra.mxu0 0.0
    %1278 = vmatprep.subr.mxu0 0.0
    %1279 = vmatpush1.msra.mxu0 0.0
    %1280 = vmatprep.subr.mxu0 0.0
    %1281 = vmatpush1.msra.mxu0 0.0
    %1282 = vmatprep.subr.mxu0 0.0
    %1283 = vmatpush1.msra.mxu0 0.0
    %1284 = vmatprep.subr.mxu0 0.0
    %1285 = vmatpush1.msra.mxu0 0.0
    %1286 = vmatprep.mubr.f32.mxu0 0.0
    %1287 = vmatmul.mubr.f32.gmra.mrb[0].mxu0 %v60
    %v1288 = vpop.f32.mrb[0].mxu0
    %v1289 = vadd.f32 0.0, %v1288
    %v1290 = vpop.f32.mrb[0].mxu0
    %1291 = vmatprep.mubr.f32.mxu0 0.0
    %1292 = vmatmul.mubr.f32.gmra.mrb[0].mxu0 %v63
    %v1293 = vpop.f32.mrb[0].mxu0
    %v1294 = vadd.f32 0.0, %v1293
    %v1295 = vpop.f32.mrb[0].mxu0
    %1296 = vmatprep.mubr.f32.mxu0 0.0
    %1297 = vmatmul.mubr.f32.gmra.mrb[0].mxu0 %v66
    %v1298 = vpop.f32.mrb[0].mxu0
    %v1299 = vadd.f32 0.0, %v1298
    %v1300 = vpop.f32.mrb[0].mxu0
    %1301 = vmatprep.mubr.f32.mxu0 0.0
    %1302 = vmatmul.mubr.f32.gmra.mrb[0].mxu0 %v69
    %v1303 = vpop.f32.mrb[0].mxu0
    %v1304 = vadd.f32 0.0, %v1303
    %v1305 = vpop.f32.mrb[0].mxu0
    %1306 = vmatprep.mubr.f32.mxu0 0.0
    %1307 = vmatmul.mubr.f32.gmra.mrb[0].mxu0 %v72
    %v1308 = vpop.f32.mrb[0].mxu0
    %v1309 = vadd.f32 0.0, %v1308
    %v1310 = vpop.f32.mrb[0].mxu0
    %1311 = vmatprep.mubr.f32.mxu0 0.0
    %1312 = vmatmul.mubr.f32.gmra.mrb[0].mxu0 %v75
    %v1313 = vpop.f32.mrb[0].mxu0
    %v1314 = vadd.f32 0.0, %v1313
    %v1315 = vpop.f32.mrb[0].mxu0
    %1316 = vmatprep.mubr.f32.mxu0 0.0
    %1317 = vmatmul.mubr.f32.gmra.mrb[0].mxu0 %v78
    %v1318 = vpop.f32.mrb[0].mxu0
    %v1319 = vadd.f32 0.0, %v1318
    %v1320 = vpop.f32.mrb[0].mxu0
    %1321 = vmatprep.mubr.f32.mxu0 0.0
    %1322 = vmatmul.mubr.f32.gmra.mrb[0].mxu0 %v81
    %v1323 = vpop.f32.mrb[0].mxu0
    %v1324 = vadd.f32 0.0, %v1323
    %v1325 = vpop.f32.mrb[0].mxu0
    %1326 = vmatprep.mubr.f32.mxu0 0.0
    %1327 = vmatmul.mubr.f32.gmra.mrb[0].mxu0 %v84
    %v1328 = vpop.f32.mrb[0].mxu0
    %v1329 = vadd.f32 0.0, %v1328
    %v1330 = vpop.f32.mrb[0].mxu0
    %1331 = vmatprep.mubr.f32.mxu0 0.0
    %1332 = vmatmul.mubr.f32.gmra.mrb[0].mxu0 %v87
    %v1333 = vpop.f32.mrb[0].mxu0
    %v1334 = vadd.f32 0.0, %v1333
    %v1335 = vpop.f32.mrb[0].mxu0
    %1336 = vmatprep.mubr.f32.mxu0 0.0
    %1337 = vmatmul.mubr.f32.gmra.mrb[0].mxu0 %v90
    %v1338 = vpop.f32.mrb[0].mxu0
    %v1339 = vadd.f32 0.0, %v1338
    %v1340 = vpop.f32.mrb[0].mxu0
    %1341 = vmatprep.mubr.f32.mxu0 0.0
    %1342 = vmatmul.mubr.f32.gmra.mrb[0].mxu0 %v93
    %v1343 = vpop.f32.mrb[0].mxu0
    %v1344 = vadd.f32 0.0, %v1343
    %v1345 = vpop.f32.mrb[0].mxu0
    %1346 = vmatprep.mubr.f32.mxu0 0.0
    %1347 = vmatmul.mubr.f32.gmra.mrb[0].mxu0 %v96
    %v1348 = vpop.f32.mrb[0].mxu0
    %v1349 = vadd.f32 0.0, %v1348
    %v1350 = vpop.f32.mrb[0].mxu0
    %1351 = vmatprep.mubr.f32.mxu0 0.0
    %1352 = vmatmul.mubr.f32.gmra.mrb[0].mxu0 %v99
    %v1353 = vpop.f32.mrb[0].mxu0
    %v1354 = vadd.f32 0.0, %v1353
    %v1355 = vpop.f32.mrb[0].mxu0
    %1356 = vmatprep.mubr.f32.mxu0 0.0
    %1357 = vmatmul.mubr.f32.gmra.mrb[0].mxu0 %v102
    %v1358 = vpop.f32.mrb[0].mxu0
    %v1359 = vadd.f32 0.0, %v1358
    %v1360 = vpop.f32.mrb[0].mxu0
    %1361 = vmatprep.mubr.f32.mxu0 0.0
    %1362 = vmatmul.mubr.f32.gmra.mrb[0].mxu0 %v105
    %v1363 = vpop.f32.mrb[0].mxu0
    %v1364 = vadd.f32 0.0, %v1363
    %v1365 = vpop.f32.mrb[0].mxu0
    %1366 = vdwg.mxu0
    %v1367 = vadd.f32 %v1206, %v1289
    %v1368 = vadd.f32 %v1207, %v1294
    %v1369 = vadd.f32 %v1208, %v1299
    %v1370 = vadd.f32 %v1209, %v1304
    %v1371 = vadd.f32 %v1210, %v1309
    %v1372 = vadd.f32 %v1211, %v1314
    %v1373 = vadd.f32 %v1212, %v1319
    %v1374 = vadd.f32 %v1213, %v1324
    %v1375 = vadd.f32 %v1214, %v1329
    %v1376 = vadd.f32 %v1215, %v1334
    %v1377 = vadd.f32 %v1216, %v1339
    %v1378 = vadd.f32 %v1217, %v1344
    %v1379 = vadd.f32 %v1218, %v1349
    %v1380 = vadd.f32 %v1219, %v1354
    %v1381 = vadd.f32 %v1220, %v1359
    %v1382 = vadd.f32 %v1221, %v1364
    %v1383 = vxor.u32 %v1367, 2147483648
    %v1384 = vxor.u32 %v1368, 2147483648
    %v1385 = vxor.u32 %v1369, 2147483648
    %v1386 = vxor.u32 %v1370, 2147483648
    %v1387 = vxor.u32 %v1371, 2147483648
    %v1388 = vxor.u32 %v1372, 2147483648
    %v1389 = vxor.u32 %v1373, 2147483648
    %v1390 = vxor.u32 %v1374, 2147483648
    %v1391 = vxor.u32 %v1379, 2147483648
    %v1392 = vxor.u32 %v1380, 2147483648
    %v1393 = vxor.u32 %v1381, 2147483648
    %v1394 = vxor.u32 %v1382, 2147483648
    %v1395 = vmul.f32 %v1383, 1.442695
    %v1396 = vpow.pop %v1395
    %v1397 = vmul.f32 %v1384, 1.442695
    %v1398 = vpow.pop %v1397
    %v1399 = vmul.f32 %v1385, 1.442695
    %v1400 = vpow.pop %v1399
    %v1401 = vmul.f32 %v1386, 1.442695
    %v1402 = vpow.pop %v1401
    %v1403 = vmul.f32 %v1387, 1.442695
    %v1404 = vpow.pop %v1403
    %v1405 = vmul.f32 %v1388, 1.442695
    %v1406 = vpow.pop %v1405
    %v1407 = vmul.f32 %v1389, 1.442695
    %v1408 = vpow.pop %v1407
    %v1409 = vmul.f32 %v1390, 1.442695
    %v1410 = vpow.pop %v1409
    %v1411 = vmul.f32 %v1391, 1.442695
    %v1412 = vpow.pop %v1411
    %v1413 = vmul.f32 %v1392, 1.442695
    %v1414 = vpow.pop %v1413
    %v1415 = vmul.f32 %v1393, 1.442695
    %v1416 = vpow.pop %v1415
    %v1417 = vmul.f32 %v1394, 1.442695
    %v1418 = vpow.pop %v1417
    %v1419 = vadd.f32 %v1396, 1.0
    %v1420 = vadd.f32 %v1398, 1.0
    %v1421 = vadd.f32 %v1400, 1.0
    %v1422 = vadd.f32 %v1402, 1.0
    %v1423 = vadd.f32 %v1404, 1.0
    %v1424 = vadd.f32 %v1406, 1.0
    %v1425 = vadd.f32 %v1408, 1.0
    %v1426 = vadd.f32 %v1410, 1.0
    %v1427 = vadd.f32 %v1412, 1.0
    %v1428 = vadd.f32 %v1414, 1.0
    %v1429 = vadd.f32 %v1416, 1.0
    %v1430 = vadd.f32 %v1418, 1.0
    %v1431 = vrcp.pop %v1419
    %v1432 = vmul.f32 1.0, %v1431
    %v1433 = vrcp.pop %v1420
    %v1434 = vmul.f32 1.0, %v1433
    %v1435 = vrcp.pop %v1421
    %v1436 = vmul.f32 1.0, %v1435
    %v1437 = vrcp.pop %v1422
    %v1438 = vmul.f32 1.0, %v1437
    %v1439 = vrcp.pop %v1423
    %v1440 = vmul.f32 1.0, %v1439
    %v1441 = vrcp.pop %v1424
    %v1442 = vmul.f32 1.0, %v1441
    %v1443 = vrcp.pop %v1425
    %v1444 = vmul.f32 1.0, %v1443
    %v1445 = vrcp.pop %v1426
    %v1446 = vmul.f32 1.0, %v1445
    %v1447 = vrcp.pop %v1427
    %v1448 = vmul.f32 1.0, %v1447
    %v1449 = vrcp.pop %v1428
    %v1450 = vmul.f32 1.0, %v1449
    %v1451 = vrcp.pop %v1429
    %v1452 = vmul.f32 1.0, %v1451
    %v1453 = vrcp.pop %v1430
    %v1454 = vmul.f32 1.0, %v1453
    %v1455 = vtanh.pop %v1375
    %v1456 = vtanh.pop %v1376
    %v1457 = vtanh.pop %v1377
    %v1458 = vtanh.pop %v1378
    %v1459 = vmul.f32 %v1440, %v1188
    %v1460 = vmul.f32 %v1442, %v1189
    %v1461 = vmul.f32 %v1444, %v1190
    %v1462 = vmul.f32 %v1446, %v1191
    %v1463 = vmul.f32 %v1432, %v1455
    %v1464 = vmul.f32 %v1434, %v1456
    %v1465 = vmul.f32 %v1436, %v1457
    %v1466 = vmul.f32 %v1438, %v1458
    %v1467 = vadd.f32 %v1459, %v1463
    %v1468 = vadd.f32 %v1460, %v1464
    %v1469 = vadd.f32 %v1461, %v1465
    %v1470 = vadd.f32 %v1462, %v1466
    %v1471 = vtanh.pop %v1467
    %v1472 = vtanh.pop %v1468
    %v1473 = vtanh.pop %v1469
    %v1474 = vtanh.pop %v1470
    %v1475 = vmul.f32 %v1448, %v1471
    %v1476 = vmul.f32 %v1450, %v1472
    %v1477 = vmul.f32 %v1452, %v1473
    %v1478 = vmul.f32 %v1454, %v1474
    %s1479 = scalar_lea.vmem [#allocation5], 128
    %1480 = vst [vmem:[%s1479] sm:$0xff] %v1475
    %1481 = vst [vmem:[%s1479 + $0x8] sm:$0xff] %v1476
    %1482 = vst [vmem:[%s1479 + $0x10] sm:$0xff] %v1477
    %1483 = vst [vmem:[%s1479 + $0x18] sm:$0xff] %v1478
    %s1484 = scalar_lea.vmem [#allocation2], 640
    %v1485 = vld [vmem:[%s1484] sm:$0xff]
    %v1486 = vld [vmem:[%s1484 + $0x8] sm:$0xff]
    %v1487 = vld [vmem:[%s1484 + $0x10] sm:$0xff]
    %v1488 = vld [vmem:[%s1484 + $0x18] sm:$0xff]
    %v1489 = vld [vmem:[%s1484 + $0x20] sm:$0xff]
    %v1490 = vld [vmem:[%s1484 + $0x28] sm:$0xff]
    %v1491 = vld [vmem:[%s1484 + $0x30] sm:$0xff]
    %v1492 = vld [vmem:[%s1484 + $0x38] sm:$0xff]
    %v1493 = vld [vmem:[%s1484 + $0x40] sm:$0xff]
    %v1494 = vld [vmem:[%s1484 + $0x48] sm:$0xff]
    %v1495 = vld [vmem:[%s1484 + $0x50] sm:$0xff]
    %v1496 = vld [vmem:[%s1484 + $0x58] sm:$0xff]
    %v1497 = vld [vmem:[%s1484 + $0x60] sm:$0xff]
    %v1498 = vld [vmem:[%s1484 + $0x68] sm:$0xff]
    %v1499 = vld [vmem:[%s1484 + $0x70] sm:$0xff]
    %v1500 = vld [vmem:[%s1484 + $0x78] sm:$0xff]
    %1501 = vmatprep.subr.mxu0 0.0
    %1502 = vmatpush1.msra.mxu0 %v1475
    %1503 = vmatprep.subr.mxu0 0.0
    %1504 = vmatpush1.msra.mxu0 %v1476
    %1505 = vmatprep.subr.mxu0 0.0
    %1506 = vmatpush1.msra.mxu0 %v1477
    %1507 = vmatprep.subr.mxu0 0.0
    %1508 = vmatpush1.msra.mxu0 %v1478
    %1509 = vmatprep.subr.mxu0 0.0
    %1510 = vmatpush1.msra.mxu0 0.0
    %1511 = vmatprep.subr.mxu0 0.0
    %1512 = vmatpush1.msra.mxu0 0.0
    %1513 = vmatprep.subr.mxu0 0.0
    %1514 = vmatpush1.msra.mxu0 0.0
    %1515 = vmatprep.subr.mxu0 0.0
    %1516 = vmatpush1.msra.mxu0 0.0
    %1517 = vmatprep.subr.mxu0 0.0
    %1518 = vmatpush1.msra.mxu0 0.0
    %1519 = vmatprep.subr.mxu0 0.0
    %1520 = vmatpush1.msra.mxu0 0.0
    %1521 = vmatprep.subr.mxu0 0.0
    %1522 = vmatpush1.msra.mxu0 0.0
    %1523 = vmatprep.subr.mxu0 0.0
    %1524 = vmatpush1.msra.mxu0 0.0
    %1525 = vmatprep.subr.mxu0 0.0
    %1526 = vmatpush1.msra.mxu0 0.0
    %1527 = vmatprep.subr.mxu0 0.0
    %1528 = vmatpush1.msra.mxu0 0.0
    %1529 = vmatprep.subr.mxu0 0.0
    %1530 = vmatpush1.msra.mxu0 0.0
    %1531 = vmatprep.subr.mxu0 0.0
    %1532 = vmatpush1.msra.mxu0 0.0
    %1533 = vmatprep.subr.mxu0 0.0
    %1534 = vmatpush1.msra.mxu0 0.0
    %1535 = vmatprep.subr.mxu0 0.0
    %1536 = vmatpush1.msra.mxu0 0.0
    %1537 = vmatprep.subr.mxu0 0.0
    %1538 = vmatpush1.msra.mxu0 0.0
    %1539 = vmatprep.subr.mxu0 0.0
    %1540 = vmatpush1.msra.mxu0 0.0
    %1541 = vmatprep.subr.mxu0 0.0
    %1542 = vmatpush1.msra.mxu0 0.0
    %1543 = vmatprep.subr.mxu0 0.0
    %1544 = vmatpush1.msra.mxu0 0.0
    %1545 = vmatprep.subr.mxu0 0.0
    %1546 = vmatpush1.msra.mxu0 0.0
    %1547 = vmatprep.subr.mxu0 0.0
    %1548 = vmatpush1.msra.mxu0 0.0
    %1549 = vmatprep.subr.mxu0 0.0
    %1550 = vmatpush1.msra.mxu0 0.0
    %1551 = vmatprep.subr.mxu0 0.0
    %1552 = vmatpush1.msra.mxu0 0.0
    %1553 = vmatprep.subr.mxu0 0.0
    %1554 = vmatpush1.msra.mxu0 0.0
    %1555 = vmatprep.subr.mxu0 0.0
    %1556 = vmatpush1.msra.mxu0 0.0
    %1557 = vmatprep.subr.mxu0 0.0
    %1558 = vmatpush1.msra.mxu0 0.0
    %1559 = vmatprep.subr.mxu0 0.0
    %1560 = vmatpush1.msra.mxu0 0.0
    %1561 = vmatprep.subr.mxu0 0.0
    %1562 = vmatpush1.msra.mxu0 0.0
    %1563 = vmatprep.subr.mxu0 0.0
    %1564 = vmatpush1.msra.mxu0 0.0
    %1565 = vmatprep.mubr.f32.mxu0 0.0
    %1566 = vmatmul.mubr.f32.gmra.mrb[0].mxu0 %v60
    %v1567 = vpop.f32.mrb[0].mxu0
    %v1568 = vadd.f32 0.0, %v1567
    %v1569 = vpop.f32.mrb[0].mxu0
    %1570 = vmatprep.mubr.f32.mxu0 0.0
    %1571 = vmatmul.mubr.f32.gmra.mrb[0].mxu0 %v63
    %v1572 = vpop.f32.mrb[0].mxu0
    %v1573 = vadd.f32 0.0, %v1572
    %v1574 = vpop.f32.mrb[0].mxu0
    %1575 = vmatprep.mubr.f32.mxu0 0.0
    %1576 = vmatmul.mubr.f32.gmra.mrb[0].mxu0 %v66
    %v1577 = vpop.f32.mrb[0].mxu0
    %v1578 = vadd.f32 0.0, %v1577
    %v1579 = vpop.f32.mrb[0].mxu0
    %1580 = vmatprep.mubr.f32.mxu0 0.0
    %1581 = vmatmul.mubr.f32.gmra.mrb[0].mxu0 %v69
    %v1582 = vpop.f32.mrb[0].mxu0
    %v1583 = vadd.f32 0.0, %v1582
    %v1584 = vpop.f32.mrb[0].mxu0
    %1585 = vmatprep.mubr.f32.mxu0 0.0
    %1586 = vmatmul.mubr.f32.gmra.mrb[0].mxu0 %v72
    %v1587 = vpop.f32.mrb[0].mxu0
    %v1588 = vadd.f32 0.0, %v1587
    %v1589 = vpop.f32.mrb[0].mxu0
    %1590 = vmatprep.mubr.f32.mxu0 0.0
    %1591 = vmatmul.mubr.f32.gmra.mrb[0].mxu0 %v75
    %v1592 = vpop.f32.mrb[0].mxu0
    %v1593 = vadd.f32 0.0, %v1592
    %v1594 = vpop.f32.mrb[0].mxu0
    %1595 = vmatprep.mubr.f32.mxu0 0.0
    %1596 = vmatmul.mubr.f32.gmra.mrb[0].mxu0 %v78
    %v1597 = vpop.f32.mrb[0].mxu0
    %v1598 = vadd.f32 0.0, %v1597
    %v1599 = vpop.f32.mrb[0].mxu0
    %1600 = vmatprep.mubr.f32.mxu0 0.0
    %1601 = vmatmul.mubr.f32.gmra.mrb[0].mxu0 %v81
    %v1602 = vpop.f32.mrb[0].mxu0
    %v1603 = vadd.f32 0.0, %v1602
    %v1604 = vpop.f32.mrb[0].mxu0
    %1605 = vmatprep.mubr.f32.mxu0 0.0
    %1606 = vmatmul.mubr.f32.gmra.mrb[0].mxu0 %v84
    %v1607 = vpop.f32.mrb[0].mxu0
    %v1608 = vadd.f32 0.0, %v1607
    %v1609 = vpop.f32.mrb[0].mxu0
    %1610 = vmatprep.mubr.f32.mxu0 0.0
    %1611 = vmatmul.mubr.f32.gmra.mrb[0].mxu0 %v87
    %v1612 = vpop.f32.mrb[0].mxu0
    %v1613 = vadd.f32 0.0, %v1612
    %v1614 = vpop.f32.mrb[0].mxu0
    %1615 = vmatprep.mubr.f32.mxu0 0.0
    %1616 = vmatmul.mubr.f32.gmra.mrb[0].mxu0 %v90
    %v1617 = vpop.f32.mrb[0].mxu0
    %v1618 = vadd.f32 0.0, %v1617
    %v1619 = vpop.f32.mrb[0].mxu0
    %1620 = vmatprep.mubr.f32.mxu0 0.0
    %1621 = vmatmul.mubr.f32.gmra.mrb[0].mxu0 %v93
    %v1622 = vpop.f32.mrb[0].mxu0
    %v1623 = vadd.f32 0.0, %v1622
    %v1624 = vpop.f32.mrb[0].mxu0
    %1625 = vmatprep.mubr.f32.mxu0 0.0
    %1626 = vmatmul.mubr.f32.gmra.mrb[0].mxu0 %v96
    %v1627 = vpop.f32.mrb[0].mxu0
    %v1628 = vadd.f32 0.0, %v1627
    %v1629 = vpop.f32.mrb[0].mxu0
    %1630 = vmatprep.mubr.f32.mxu0 0.0
    %1631 = vmatmul.mubr.f32.gmra.mrb[0].mxu0 %v99
    %v1632 = vpop.f32.mrb[0].mxu0
    %v1633 = vadd.f32 0.0, %v1632
    %v1634 = vpop.f32.mrb[0].mxu0
    %1635 = vmatprep.mubr.f32.mxu0 0.0
    %1636 = vmatmul.mubr.f32.gmra.mrb[0].mxu0 %v102
    %v1637 = vpop.f32.mrb[0].mxu0
    %v1638 = vadd.f32 0.0, %v1637
    %v1639 = vpop.f32.mrb[0].mxu0
    %1640 = vmatprep.mubr.f32.mxu0 0.0
    %1641 = vmatmul.mubr.f32.gmra.mrb[0].mxu0 %v105
    %v1642 = vpop.f32.mrb[0].mxu0
    %v1643 = vadd.f32 0.0, %v1642
    %v1644 = vpop.f32.mrb[0].mxu0
    %1645 = vdwg.mxu0
    %v1646 = vadd.f32 %v1485, %v1568
    %v1647 = vadd.f32 %v1486, %v1573
    %v1648 = vadd.f32 %v1487, %v1578
    %v1649 = vadd.f32 %v1488, %v1583
    %v1650 = vadd.f32 %v1489, %v1588
    %v1651 = vadd.f32 %v1490, %v1593
    %v1652 = vadd.f32 %v1491, %v1598
    %v1653 = vadd.f32 %v1492, %v1603
    %v1654 = vadd.f32 %v1493, %v1608
    %v1655 = vadd.f32 %v1494, %v1613
    %v1656 = vadd.f32 %v1495, %v1618
    %v1657 = vadd.f32 %v1496, %v1623
    %v1658 = vadd.f32 %v1497, %v1628
    %v1659 = vadd.f32 %v1498, %v1633
    %v1660 = vadd.f32 %v1499, %v1638
    %v1661 = vadd.f32 %v1500, %v1643
    %v1662 = vxor.u32 %v1646, 2147483648
    %v1663 = vxor.u32 %v1647, 2147483648
    %v1664 = vxor.u32 %v1648, 2147483648
    %v1665 = vxor.u32 %v1649, 2147483648
    %v1666 = vxor.u32 %v1650, 2147483648
    %v1667 = vxor.u32 %v1651, 2147483648
    %v1668 = vxor.u32 %v1652, 2147483648
    %v1669 = vxor.u32 %v1653, 2147483648
    %v1670 = vxor.u32 %v1658, 2147483648
    %v1671 = vxor.u32 %v1659, 2147483648
    %v1672 = vxor.u32 %v1660, 2147483648
    %v1673 = vxor.u32 %v1661, 2147483648
    %v1674 = vmul.f32 %v1662, 1.442695
    %v1675 = vpow.pop %v1674
    %v1676 = vmul.f32 %v1663, 1.442695
    %v1677 = vpow.pop %v1676
    %v1678 = vmul.f32 %v1664, 1.442695
    %v1679 = vpow.pop %v1678
    %v1680 = vmul.f32 %v1665, 1.442695
    %v1681 = vpow.pop %v1680
    %v1682 = vmul.f32 %v1666, 1.442695
    %v1683 = vpow.pop %v1682
    %v1684 = vmul.f32 %v1667, 1.442695
    %v1685 = vpow.pop %v1684
    %v1686 = vmul.f32 %v1668, 1.442695
    %v1687 = vpow.pop %v1686
    %v1688 = vmul.f32 %v1669, 1.442695
    %v1689 = vpow.pop %v1688
    %v1690 = vmul.f32 %v1670, 1.442695
    %v1691 = vpow.pop %v1690
    %v1692 = vmul.f32 %v1671, 1.442695
    %v1693 = vpow.pop %v1692
    %v1694 = vmul.f32 %v1672, 1.442695
    %v1695 = vpow.pop %v1694
    %v1696 = vmul.f32 %v1673, 1.442695
    %v1697 = vpow.pop %v1696
    %v1698 = vadd.f32 %v1675, 1.0
    %v1699 = vadd.f32 %v1677, 1.0
    %v1700 = vadd.f32 %v1679, 1.0
    %v1701 = vadd.f32 %v1681, 1.0
    %v1702 = vadd.f32 %v1683, 1.0
    %v1703 = vadd.f32 %v1685, 1.0
    %v1704 = vadd.f32 %v1687, 1.0
    %v1705 = vadd.f32 %v1689, 1.0
    %v1706 = vadd.f32 %v1691, 1.0
    %v1707 = vadd.f32 %v1693, 1.0
    %v1708 = vadd.f32 %v1695, 1.0
    %v1709 = vadd.f32 %v1697, 1.0
    %v1710 = vrcp.pop %v1698
    %v1711 = vmul.f32 1.0, %v1710
    %v1712 = vrcp.pop %v1699
    %v1713 = vmul.f32 1.0, %v1712
    %v1714 = vrcp.pop %v1700
    %v1715 = vmul.f32 1.0, %v1714
    %v1716 = vrcp.pop %v1701
    %v1717 = vmul.f32 1.0, %v1716
    %v1718 = vrcp.pop %v1702
    %v1719 = vmul.f32 1.0, %v1718
    %v1720 = vrcp.pop %v1703
    %v1721 = vmul.f32 1.0, %v1720
    %v1722 = vrcp.pop %v1704
    %v1723 = vmul.f32 1.0, %v1722
    %v1724 = vrcp.pop %v1705
    %v1725 = vmul.f32 1.0, %v1724
    %v1726 = vrcp.pop %v1706
    %v1727 = vmul.f32 1.0, %v1726
    %v1728 = vrcp.pop %v1707
    %v1729 = vmul.f32 1.0, %v1728
    %v1730 = vrcp.pop %v1708
    %v1731 = vmul.f32 1.0, %v1730
    %v1732 = vrcp.pop %v1709
    %v1733 = vmul.f32 1.0, %v1732
    %v1734 = vtanh.pop %v1654
    %v1735 = vtanh.pop %v1655
    %v1736 = vtanh.pop %v1656
    %v1737 = vtanh.pop %v1657
    %v1738 = vmul.f32 %v1719, %v1467
    %v1739 = vmul.f32 %v1721, %v1468
    %v1740 = vmul.f32 %v1723, %v1469
    %v1741 = vmul.f32 %v1725, %v1470
    %v1742 = vmul.f32 %v1711, %v1734
    %v1743 = vmul.f32 %v1713, %v1735
    %v1744 = vmul.f32 %v1715, %v1736
    %v1745 = vmul.f32 %v1717, %v1737
    %v1746 = vadd.f32 %v1738, %v1742
    %v1747 = vadd.f32 %v1739, %v1743
    %v1748 = vadd.f32 %v1740, %v1744
    %v1749 = vadd.f32 %v1741, %v1745
    %v1750 = vtanh.pop %v1746
    %v1751 = vtanh.pop %v1747
    %v1752 = vtanh.pop %v1748
    %v1753 = vtanh.pop %v1749
    %v1754 = vmul.f32 %v1727, %v1750
    %v1755 = vmul.f32 %v1729, %v1751
    %v1756 = vmul.f32 %v1731, %v1752
    %v1757 = vmul.f32 %v1733, %v1753
    %s1758 = scalar_lea.vmem [#allocation5], 160
    %1759 = vst [vmem:[%s1758] sm:$0xff] %v1754
    %1760 = vst [vmem:[%s1758 + $0x8] sm:$0xff] %v1755
    %1761 = vst [vmem:[%s1758 + $0x10] sm:$0xff] %v1756
    %1762 = vst [vmem:[%s1758 + $0x18] sm:$0xff] %v1757
    %s1763 = scalar_lea.vmem [#allocation2], 768
    %v1764 = vld [vmem:[%s1763] sm:$0xff]
    %v1765 = vld [vmem:[%s1763 + $0x8] sm:$0xff]
    %v1766 = vld [vmem:[%s1763 + $0x10] sm:$0xff]
    %v1767 = vld [vmem:[%s1763 + $0x18] sm:$0xff]
    %v1768 = vld [vmem:[%s1763 + $0x20] sm:$0xff]
    %v1769 = vld [vmem:[%s1763 + $0x28] sm:$0xff]
    %v1770 = vld [vmem:[%s1763 + $0x30] sm:$0xff]
    %v1771 = vld [vmem:[%s1763 + $0x38] sm:$0xff]
    %v1772 = vld [vmem:[%s1763 + $0x40] sm:$0xff]
    %v1773 = vld [vmem:[%s1763 + $0x48] sm:$0xff]
    %v1774 = vld [vmem:[%s1763 + $0x50] sm:$0xff]
    %v1775 = vld [vmem:[%s1763 + $0x58] sm:$0xff]
    %v1776 = vld [vmem:[%s1763 + $0x60] sm:$0xff]
    %v1777 = vld [vmem:[%s1763 + $0x68] sm:$0xff]
    %v1778 = vld [vmem:[%s1763 + $0x70] sm:$0xff]
    %v1779 = vld [vmem:[%s1763 + $0x78] sm:$0xff]
    %1780 = vmatprep.subr.mxu0 0.0
    %1781 = vmatpush1.msra.mxu0 %v1754
    %1782 = vmatprep.subr.mxu0 0.0
    %1783 = vmatpush1.msra.mxu0 %v1755
    %1784 = vmatprep.subr.mxu0 0.0
    %1785 = vmatpush1.msra.mxu0 %v1756
    %1786 = vmatprep.subr.mxu0 0.0
    %1787 = vmatpush1.msra.mxu0 %v1757
    %1788 = vmatprep.subr.mxu0 0.0
    %1789 = vmatpush1.msra.mxu0 0.0
    %1790 = vmatprep.subr.mxu0 0.0
    %1791 = vmatpush1.msra.mxu0 0.0
    %1792 = vmatprep.subr.mxu0 0.0
    %1793 = vmatpush1.msra.mxu0 0.0
    %1794 = vmatprep.subr.mxu0 0.0
    %1795 = vmatpush1.msra.mxu0 0.0
    %1796 = vmatprep.subr.mxu0 0.0
    %1797 = vmatpush1.msra.mxu0 0.0
    %1798 = vmatprep.subr.mxu0 0.0
    %1799 = vmatpush1.msra.mxu0 0.0
    %1800 = vmatprep.subr.mxu0 0.0
    %1801 = vmatpush1.msra.mxu0 0.0
    %1802 = vmatprep.subr.mxu0 0.0
    %1803 = vmatpush1.msra.mxu0 0.0
    %1804 = vmatprep.subr.mxu0 0.0
    %1805 = vmatpush1.msra.mxu0 0.0
    %1806 = vmatprep.subr.mxu0 0.0
    %1807 = vmatpush1.msra.mxu0 0.0
    %1808 = vmatprep.subr.mxu0 0.0
    %1809 = vmatpush1.msra.mxu0 0.0
    %1810 = vmatprep.subr.mxu0 0.0
    %1811 = vmatpush1.msra.mxu0 0.0
    %1812 = vmatprep.subr.mxu0 0.0
    %1813 = vmatpush1.msra.mxu0 0.0
    %1814 = vmatprep.subr.mxu0 0.0
    %1815 = vmatpush1.msra.mxu0 0.0
    %1816 = vmatprep.subr.mxu0 0.0
    %1817 = vmatpush1.msra.mxu0 0.0
    %1818 = vmatprep.subr.mxu0 0.0
    %1819 = vmatpush1.msra.mxu0 0.0
    %1820 = vmatprep.subr.mxu0 0.0
    %1821 = vmatpush1.msra.mxu0 0.0
    %1822 = vmatprep.subr.mxu0 0.0
    %1823 = vmatpush1.msra.mxu0 0.0
    %1824 = vmatprep.subr.mxu0 0.0
    %1825 = vmatpush1.msra.mxu0 0.0
    %1826 = vmatprep.subr.mxu0 0.0
    %1827 = vmatpush1.msra.mxu0 0.0
    %1828 = vmatprep.subr.mxu0 0.0
    %1829 = vmatpush1.msra.mxu0 0.0
    %1830 = vmatprep.subr.mxu0 0.0
    %1831 = vmatpush1.msra.mxu0 0.0
    %1832 = vmatprep.subr.mxu0 0.0
    %1833 = vmatpush1.msra.mxu0 0.0
    %1834 = vmatprep.subr.mxu0 0.0
    %1835 = vmatpush1.msra.mxu0 0.0
    %1836 = vmatprep.subr.mxu0 0.0
    %1837 = vmatpush1.msra.mxu0 0.0
    %1838 = vmatprep.subr.mxu0 0.0
    %1839 = vmatpush1.msra.mxu0 0.0
    %1840 = vmatprep.subr.mxu0 0.0
    %1841 = vmatpush1.msra.mxu0 0.0
    %1842 = vmatprep.subr.mxu0 0.0
    %1843 = vmatpush1.msra.mxu0 0.0
    %1844 = vmatprep.mubr.f32.mxu0 0.0
    %1845 = vmatmul.mubr.f32.gmra.mrb[0].mxu0 %v60
    %v1846 = vpop.f32.mrb[0].mxu0
    %v1847 = vadd.f32 0.0, %v1846
    %v1848 = vpop.f32.mrb[0].mxu0
    %1849 = vmatprep.mubr.f32.mxu0 0.0
    %1850 = vmatmul.mubr.f32.gmra.mrb[0].mxu0 %v63
    %v1851 = vpop.f32.mrb[0].mxu0
    %v1852 = vadd.f32 0.0, %v1851
    %v1853 = vpop.f32.mrb[0].mxu0
    %1854 = vmatprep.mubr.f32.mxu0 0.0
    %1855 = vmatmul.mubr.f32.gmra.mrb[0].mxu0 %v66
    %v1856 = vpop.f32.mrb[0].mxu0
    %v1857 = vadd.f32 0.0, %v1856
    %v1858 = vpop.f32.mrb[0].mxu0
    %1859 = vmatprep.mubr.f32.mxu0 0.0
    %1860 = vmatmul.mubr.f32.gmra.mrb[0].mxu0 %v69
    %v1861 = vpop.f32.mrb[0].mxu0
    %v1862 = vadd.f32 0.0, %v1861
    %v1863 = vpop.f32.mrb[0].mxu0
    %1864 = vmatprep.mubr.f32.mxu0 0.0
    %1865 = vmatmul.mubr.f32.gmra.mrb[0].mxu0 %v72
    %v1866 = vpop.f32.mrb[0].mxu0
    %v1867 = vadd.f32 0.0, %v1866
    %v1868 = vpop.f32.mrb[0].mxu0
    %1869 = vmatprep.mubr.f32.mxu0 0.0
    %1870 = vmatmul.mubr.f32.gmra.mrb[0].mxu0 %v75
    %v1871 = vpop.f32.mrb[0].mxu0
    %v1872 = vadd.f32 0.0, %v1871
    %v1873 = vpop.f32.mrb[0].mxu0
    %1874 = vmatprep.mubr.f32.mxu0 0.0
    %1875 = vmatmul.mubr.f32.gmra.mrb[0].mxu0 %v78
    %v1876 = vpop.f32.mrb[0].mxu0
    %v1877 = vadd.f32 0.0, %v1876
    %v1878 = vpop.f32.mrb[0].mxu0
    %1879 = vmatprep.mubr.f32.mxu0 0.0
    %1880 = vmatmul.mubr.f32.gmra.mrb[0].mxu0 %v81
    %v1881 = vpop.f32.mrb[0].mxu0
    %v1882 = vadd.f32 0.0, %v1881
    %v1883 = vpop.f32.mrb[0].mxu0
    %1884 = vmatprep.mubr.f32.mxu0 0.0
    %1885 = vmatmul.mubr.f32.gmra.mrb[0].mxu0 %v84
    %v1886 = vpop.f32.mrb[0].mxu0
    %v1887 = vadd.f32 0.0, %v1886
    %v1888 = vpop.f32.mrb[0].mxu0
    %1889 = vmatprep.mubr.f32.mxu0 0.0
    %1890 = vmatmul.mubr.f32.gmra.mrb[0].mxu0 %v87
    %v1891 = vpop.f32.mrb[0].mxu0
    %v1892 = vadd.f32 0.0, %v1891
    %v1893 = vpop.f32.mrb[0].mxu0
    %1894 = vmatprep.mubr.f32.mxu0 0.0
    %1895 = vmatmul.mubr.f32.gmra.mrb[0].mxu0 %v90
    %v1896 = vpop.f32.mrb[0].mxu0
    %v1897 = vadd.f32 0.0, %v1896
    %v1898 = vpop.f32.mrb[0].mxu0
    %1899 = vmatprep.mubr.f32.mxu0 0.0
    %1900 = vmatmul.mubr.f32.gmra.mrb[0].mxu0 %v93
    %v1901 = vpop.f32.mrb[0].mxu0
    %v1902 = vadd.f32 0.0, %v1901
    %v1903 = vpop.f32.mrb[0].mxu0
    %1904 = vmatprep.mubr.f32.mxu0 0.0
    %1905 = vmatmul.mubr.f32.gmra.mrb[0].mxu0 %v96
    %v1906 = vpop.f32.mrb[0].mxu0
    %v1907 = vadd.f32 0.0, %v1906
    %v1908 = vpop.f32.mrb[0].mxu0
    %1909 = vmatprep.mubr.f32.mxu0 0.0
    %1910 = vmatmul.mubr.f32.gmra.mrb[0].mxu0 %v99
    %v1911 = vpop.f32.mrb[0].mxu0
    %v1912 = vadd.f32 0.0, %v1911
    %v1913 = vpop.f32.mrb[0].mxu0
    %1914 = vmatprep.mubr.f32.mxu0 0.0
    %1915 = vmatmul.mubr.f32.gmra.mrb[0].mxu0 %v102
    %v1916 = vpop.f32.mrb[0].mxu0
    %v1917 = vadd.f32 0.0, %v1916
    %v1918 = vpop.f32.mrb[0].mxu0
    %1919 = vmatprep.mubr.f32.mxu0 0.0
    %1920 = vmatmul.mubr.f32.gmra.mrb[0].mxu0 %v105
    %v1921 = vpop.f32.mrb[0].mxu0
    %v1922 = vadd.f32 0.0, %v1921
    %v1923 = vpop.f32.mrb[0].mxu0
    %1924 = vdwg.mxu0
    %v1925 = vadd.f32 %v1764, %v1847
    %v1926 = vadd.f32 %v1765, %v1852
    %v1927 = vadd.f32 %v1766, %v1857
    %v1928 = vadd.f32 %v1767, %v1862
    %v1929 = vadd.f32 %v1768, %v1867
    %v1930 = vadd.f32 %v1769, %v1872
    %v1931 = vadd.f32 %v1770, %v1877
    %v1932 = vadd.f32 %v1771, %v1882
    %v1933 = vadd.f32 %v1772, %v1887
    %v1934 = vadd.f32 %v1773, %v1892
    %v1935 = vadd.f32 %v1774, %v1897
    %v1936 = vadd.f32 %v1775, %v1902
    %v1937 = vadd.f32 %v1776, %v1907
    %v1938 = vadd.f32 %v1777, %v1912
    %v1939 = vadd.f32 %v1778, %v1917
    %v1940 = vadd.f32 %v1779, %v1922
    %v1941 = vxor.u32 %v1925, 2147483648
    %v1942 = vxor.u32 %v1926, 2147483648
    %v1943 = vxor.u32 %v1927, 2147483648
    %v1944 = vxor.u32 %v1928, 2147483648
    %v1945 = vxor.u32 %v1929, 2147483648
    %v1946 = vxor.u32 %v1930, 2147483648
    %v1947 = vxor.u32 %v1931, 2147483648
    %v1948 = vxor.u32 %v1932, 2147483648
    %v1949 = vxor.u32 %v1937, 2147483648
    %v1950 = vxor.u32 %v1938, 2147483648
    %v1951 = vxor.u32 %v1939, 2147483648
    %v1952 = vxor.u32 %v1940, 2147483648
    %v1953 = vmul.f32 %v1941, 1.442695
    %v1954 = vpow.pop %v1953
    %v1955 = vmul.f32 %v1942, 1.442695
    %v1956 = vpow.pop %v1955
    %v1957 = vmul.f32 %v1943, 1.442695
    %v1958 = vpow.pop %v1957
    %v1959 = vmul.f32 %v1944, 1.442695
    %v1960 = vpow.pop %v1959
    %v1961 = vmul.f32 %v1945, 1.442695
    %v1962 = vpow.pop %v1961
    %v1963 = vmul.f32 %v1946, 1.442695
    %v1964 = vpow.pop %v1963
    %v1965 = vmul.f32 %v1947, 1.442695
    %v1966 = vpow.pop %v1965
    %v1967 = vmul.f32 %v1948, 1.442695
    %v1968 = vpow.pop %v1967
    %v1969 = vmul.f32 %v1949, 1.442695
    %v1970 = vpow.pop %v1969
    %v1971 = vmul.f32 %v1950, 1.442695
    %v1972 = vpow.pop %v1971
    %v1973 = vmul.f32 %v1951, 1.442695
    %v1974 = vpow.pop %v1973
    %v1975 = vmul.f32 %v1952, 1.442695
    %v1976 = vpow.pop %v1975
    %v1977 = vadd.f32 %v1954, 1.0
    %v1978 = vadd.f32 %v1956, 1.0
    %v1979 = vadd.f32 %v1958, 1.0
    %v1980 = vadd.f32 %v1960, 1.0
    %v1981 = vadd.f32 %v1962, 1.0
    %v1982 = vadd.f32 %v1964, 1.0
    %v1983 = vadd.f32 %v1966, 1.0
    %v1984 = vadd.f32 %v1968, 1.0
    %v1985 = vadd.f32 %v1970, 1.0
    %v1986 = vadd.f32 %v1972, 1.0
    %v1987 = vadd.f32 %v1974, 1.0
    %v1988 = vadd.f32 %v1976, 1.0
    %v1989 = vrcp.pop %v1977
    %v1990 = vmul.f32 1.0, %v1989
    %v1991 = vrcp.pop %v1978
    %v1992 = vmul.f32 1.0, %v1991
    %v1993 = vrcp.pop %v1979
    %v1994 = vmul.f32 1.0, %v1993
    %v1995 = vrcp.pop %v1980
    %v1996 = vmul.f32 1.0, %v1995
    %v1997 = vrcp.pop %v1981
    %v1998 = vmul.f32 1.0, %v1997
    %v1999 = vrcp.pop %v1982
    %v2000 = vmul.f32 1.0, %v1999
    %v2001 = vrcp.pop %v1983
    %v2002 = vmul.f32 1.0, %v2001
    %v2003 = vrcp.pop %v1984
    %v2004 = vmul.f32 1.0, %v2003
    %v2005 = vrcp.pop %v1985
    %v2006 = vmul.f32 1.0, %v2005
    %v2007 = vrcp.pop %v1986
    %v2008 = vmul.f32 1.0, %v2007
    %v2009 = vrcp.pop %v1987
    %v2010 = vmul.f32 1.0, %v2009
    %v2011 = vrcp.pop %v1988
    %v2012 = vmul.f32 1.0, %v2011
    %v2013 = vtanh.pop %v1933
    %v2014 = vtanh.pop %v1934
    %v2015 = vtanh.pop %v1935
    %v2016 = vtanh.pop %v1936
    %v2017 = vmul.f32 %v1998, %v1746
    %v2018 = vmul.f32 %v2000, %v1747
    %v2019 = vmul.f32 %v2002, %v1748
    %v2020 = vmul.f32 %v2004, %v1749
    %v2021 = vmul.f32 %v1990, %v2013
    %v2022 = vmul.f32 %v1992, %v2014
    %v2023 = vmul.f32 %v1994, %v2015
    %v2024 = vmul.f32 %v1996, %v2016
    %v2025 = vadd.f32 %v2017, %v2021
    %v2026 = vadd.f32 %v2018, %v2022
    %v2027 = vadd.f32 %v2019, %v2023
    %v2028 = vadd.f32 %v2020, %v2024
    %v2029 = vtanh.pop %v2025
    %v2030 = vtanh.pop %v2026
    %v2031 = vtanh.pop %v2027
    %v2032 = vtanh.pop %v2028
    %v2033 = vmul.f32 %v2006, %v2029
    %v2034 = vmul.f32 %v2008, %v2030
    %v2035 = vmul.f32 %v2010, %v2031
    %v2036 = vmul.f32 %v2012, %v2032
    %s2037 = scalar_lea.vmem [#allocation5], 192
    %2038 = vst [vmem:[%s2037] sm:$0xff] %v2033
    %2039 = vst [vmem:[%s2037 + $0x8] sm:$0xff] %v2034
    %2040 = vst [vmem:[%s2037 + $0x10] sm:$0xff] %v2035
    %2041 = vst [vmem:[%s2037 + $0x18] sm:$0xff] %v2036
    %s2042 = scalar_lea.vmem [#allocation2], 896
    %v2043 = vld [vmem:[%s2042] sm:$0xff]
    %v2044 = vld [vmem:[%s2042 + $0x8] sm:$0xff]
    %v2045 = vld [vmem:[%s2042 + $0x10] sm:$0xff]
    %v2046 = vld [vmem:[%s2042 + $0x18] sm:$0xff]
    %v2047 = vld [vmem:[%s2042 + $0x20] sm:$0xff]
    %v2048 = vld [vmem:[%s2042 + $0x28] sm:$0xff]
    %v2049 = vld [vmem:[%s2042 + $0x30] sm:$0xff]
    %v2050 = vld [vmem:[%s2042 + $0x38] sm:$0xff]
    %v2051 = vld [vmem:[%s2042 + $0x40] sm:$0xff]
    %v2052 = vld [vmem:[%s2042 + $0x48] sm:$0xff]
    %v2053 = vld [vmem:[%s2042 + $0x50] sm:$0xff]
    %v2054 = vld [vmem:[%s2042 + $0x58] sm:$0xff]
    %v2055 = vld [vmem:[%s2042 + $0x60] sm:$0xff]
    %v2056 = vld [vmem:[%s2042 + $0x68] sm:$0xff]
    %v2057 = vld [vmem:[%s2042 + $0x70] sm:$0xff]
    %v2058 = vld [vmem:[%s2042 + $0x78] sm:$0xff]
    %2059 = vmatprep.subr.mxu0 0.0
    %2060 = vmatpush1.msra.mxu0 %v2033
    %2061 = vmatprep.subr.mxu0 0.0
    %2062 = vmatpush1.msra.mxu0 %v2034
    %2063 = vmatprep.subr.mxu0 0.0
    %2064 = vmatpush1.msra.mxu0 %v2035
    %2065 = vmatprep.subr.mxu0 0.0
    %2066 = vmatpush1.msra.mxu0 %v2036
    %2067 = vmatprep.subr.mxu0 0.0
    %2068 = vmatpush1.msra.mxu0 0.0
    %2069 = vmatprep.subr.mxu0 0.0
    %2070 = vmatpush1.msra.mxu0 0.0
    %2071 = vmatprep.subr.mxu0 0.0
    %2072 = vmatpush1.msra.mxu0 0.0
    %2073 = vmatprep.subr.mxu0 0.0
    %2074 = vmatpush1.msra.mxu0 0.0
    %2075 = vmatprep.subr.mxu0 0.0
    %2076 = vmatpush1.msra.mxu0 0.0
    %2077 = vmatprep.subr.mxu0 0.0
    %2078 = vmatpush1.msra.mxu0 0.0
    %2079 = vmatprep.subr.mxu0 0.0
    %2080 = vmatpush1.msra.mxu0 0.0
    %2081 = vmatprep.subr.mxu0 0.0
    %2082 = vmatpush1.msra.mxu0 0.0
    %2083 = vmatprep.subr.mxu0 0.0
    %2084 = vmatpush1.msra.mxu0 0.0
    %2085 = vmatprep.subr.mxu0 0.0
    %2086 = vmatpush1.msra.mxu0 0.0
    %2087 = vmatprep.subr.mxu0 0.0
    %2088 = vmatpush1.msra.mxu0 0.0
    %2089 = vmatprep.subr.mxu0 0.0
    %2090 = vmatpush1.msra.mxu0 0.0
    %2091 = vmatprep.subr.mxu0 0.0
    %2092 = vmatpush1.msra.mxu0 0.0
    %2093 = vmatprep.subr.mxu0 0.0
    %2094 = vmatpush1.msra.mxu0 0.0
    %2095 = vmatprep.subr.mxu0 0.0
    %2096 = vmatpush1.msra.mxu0 0.0
    %2097 = vmatprep.subr.mxu0 0.0
    %2098 = vmatpush1.msra.mxu0 0.0
    %2099 = vmatprep.subr.mxu0 0.0
    %2100 = vmatpush1.msra.mxu0 0.0
    %2101 = vmatprep.subr.mxu0 0.0
    %2102 = vmatpush1.msra.mxu0 0.0
    %2103 = vmatprep.subr.mxu0 0.0
    %2104 = vmatpush1.msra.mxu0 0.0
    %2105 = vmatprep.subr.mxu0 0.0
    %2106 = vmatpush1.msra.mxu0 0.0
    %2107 = vmatprep.subr.mxu0 0.0
    %2108 = vmatpush1.msra.mxu0 0.0
    %2109 = vmatprep.subr.mxu0 0.0
    %2110 = vmatpush1.msra.mxu0 0.0
    %2111 = vmatprep.subr.mxu0 0.0
    %2112 = vmatpush1.msra.mxu0 0.0
    %2113 = vmatprep.subr.mxu0 0.0
    %2114 = vmatpush1.msra.mxu0 0.0
    %2115 = vmatprep.subr.mxu0 0.0
    %2116 = vmatpush1.msra.mxu0 0.0
    %2117 = vmatprep.subr.mxu0 0.0
    %2118 = vmatpush1.msra.mxu0 0.0
    %2119 = vmatprep.subr.mxu0 0.0
    %2120 = vmatpush1.msra.mxu0 0.0
    %2121 = vmatprep.subr.mxu0 0.0
    %2122 = vmatpush1.msra.mxu0 0.0
    %2123 = vmatprep.mubr.f32.mxu0 0.0
    %2124 = vmatmul.mubr.f32.gmra.mrb[0].mxu0 %v60
    %v2125 = vpop.f32.mrb[0].mxu0
    %v2126 = vadd.f32 0.0, %v2125
    %v2127 = vpop.f32.mrb[0].mxu0
    %2128 = vmatprep.mubr.f32.mxu0 0.0
    %2129 = vmatmul.mubr.f32.gmra.mrb[0].mxu0 %v63
    %v2130 = vpop.f32.mrb[0].mxu0
    %v2131 = vadd.f32 0.0, %v2130
    %v2132 = vpop.f32.mrb[0].mxu0
    %2133 = vmatprep.mubr.f32.mxu0 0.0
    %2134 = vmatmul.mubr.f32.gmra.mrb[0].mxu0 %v66
    %v2135 = vpop.f32.mrb[0].mxu0
    %v2136 = vadd.f32 0.0, %v2135
    %v2137 = vpop.f32.mrb[0].mxu0
    %2138 = vmatprep.mubr.f32.mxu0 0.0
    %2139 = vmatmul.mubr.f32.gmra.mrb[0].mxu0 %v69
    %v2140 = vpop.f32.mrb[0].mxu0
    %v2141 = vadd.f32 0.0, %v2140
    %v2142 = vpop.f32.mrb[0].mxu0
    %2143 = vmatprep.mubr.f32.mxu0 0.0
    %2144 = vmatmul.mubr.f32.gmra.mrb[0].mxu0 %v72
    %v2145 = vpop.f32.mrb[0].mxu0
    %v2146 = vadd.f32 0.0, %v2145
    %v2147 = vpop.f32.mrb[0].mxu0
    %2148 = vmatprep.mubr.f32.mxu0 0.0
    %2149 = vmatmul.mubr.f32.gmra.mrb[0].mxu0 %v75
    %v2150 = vpop.f32.mrb[0].mxu0
    %v2151 = vadd.f32 0.0, %v2150
    %v2152 = vpop.f32.mrb[0].mxu0
    %2153 = vmatprep.mubr.f32.mxu0 0.0
    %2154 = vmatmul.mubr.f32.gmra.mrb[0].mxu0 %v78
    %v2155 = vpop.f32.mrb[0].mxu0
    %v2156 = vadd.f32 0.0, %v2155
    %v2157 = vpop.f32.mrb[0].mxu0
    %2158 = vmatprep.mubr.f32.mxu0 0.0
    %2159 = vmatmul.mubr.f32.gmra.mrb[0].mxu0 %v81
    %v2160 = vpop.f32.mrb[0].mxu0
    %v2161 = vadd.f32 0.0, %v2160
    %v2162 = vpop.f32.mrb[0].mxu0
    %2163 = vmatprep.mubr.f32.mxu0 0.0
    %2164 = vmatmul.mubr.f32.gmra.mrb[0].mxu0 %v84
    %v2165 = vpop.f32.mrb[0].mxu0
    %v2166 = vadd.f32 0.0, %v2165
    %v2167 = vpop.f32.mrb[0].mxu0
    %2168 = vmatprep.mubr.f32.mxu0 0.0
    %2169 = vmatmul.mubr.f32.gmra.mrb[0].mxu0 %v87
    %v2170 = vpop.f32.mrb[0].mxu0
    %v2171 = vadd.f32 0.0, %v2170
    %v2172 = vpop.f32.mrb[0].mxu0
    %2173 = vmatprep.mubr.f32.mxu0 0.0
    %2174 = vmatmul.mubr.f32.gmra.mrb[0].mxu0 %v90
    %v2175 = vpop.f32.mrb[0].mxu0
    %v2176 = vadd.f32 0.0, %v2175
    %v2177 = vpop.f32.mrb[0].mxu0
    %2178 = vmatprep.mubr.f32.mxu0 0.0
    %2179 = vmatmul.mubr.f32.gmra.mrb[0].mxu0 %v93
    %v2180 = vpop.f32.mrb[0].mxu0
    %v2181 = vadd.f32 0.0, %v2180
    %v2182 = vpop.f32.mrb[0].mxu0
    %2183 = vmatprep.mubr.f32.mxu0 0.0
    %2184 = vmatmul.mubr.f32.gmra.mrb[0].mxu0 %v96
    %v2185 = vpop.f32.mrb[0].mxu0
    %v2186 = vadd.f32 0.0, %v2185
    %v2187 = vpop.f32.mrb[0].mxu0
    %2188 = vmatprep.mubr.f32.mxu0 0.0
    %2189 = vmatmul.mubr.f32.gmra.mrb[0].mxu0 %v99
    %v2190 = vpop.f32.mrb[0].mxu0
    %v2191 = vadd.f32 0.0, %v2190
    %v2192 = vpop.f32.mrb[0].mxu0
    %2193 = vmatprep.mubr.f32.mxu0 0.0
    %2194 = vmatmul.mubr.f32.gmra.mrb[0].mxu0 %v102
    %v2195 = vpop.f32.mrb[0].mxu0
    %v2196 = vadd.f32 0.0, %v2195
    %v2197 = vpop.f32.mrb[0].mxu0
    %2198 = vmatprep.mubr.f32.mxu0 0.0
    %2199 = vmatmul.mubr.f32.gmra.mrb[0].mxu0 %v105
    %v2200 = vpop.f32.mrb[0].mxu0
    %v2201 = vadd.f32 0.0, %v2200
    %v2202 = vpop.f32.mrb[0].mxu0
    %2203 = vdwg.mxu0
    %v2204 = vadd.f32 %v2043, %v2126
    %v2205 = vadd.f32 %v2044, %v2131
    %v2206 = vadd.f32 %v2045, %v2136
    %v2207 = vadd.f32 %v2046, %v2141
    %v2208 = vadd.f32 %v2047, %v2146
    %v2209 = vadd.f32 %v2048, %v2151
    %v2210 = vadd.f32 %v2049, %v2156
    %v2211 = vadd.f32 %v2050, %v2161
    %v2212 = vadd.f32 %v2051, %v2166
    %v2213 = vadd.f32 %v2052, %v2171
    %v2214 = vadd.f32 %v2053, %v2176
    %v2215 = vadd.f32 %v2054, %v2181
    %v2216 = vadd.f32 %v2055, %v2186
    %v2217 = vadd.f32 %v2056, %v2191
    %v2218 = vadd.f32 %v2057, %v2196
    %v2219 = vadd.f32 %v2058, %v2201
    %v2220 = vxor.u32 %v2204, 2147483648
    %v2221 = vxor.u32 %v2205, 2147483648
    %v2222 = vxor.u32 %v2206, 2147483648
    %v2223 = vxor.u32 %v2207, 2147483648
    %v2224 = vxor.u32 %v2208, 2147483648
    %v2225 = vxor.u32 %v2209, 2147483648
    %v2226 = vxor.u32 %v2210, 2147483648
    %v2227 = vxor.u32 %v2211, 2147483648
    %v2228 = vxor.u32 %v2216, 2147483648
    %v2229 = vxor.u32 %v2217, 2147483648
    %v2230 = vxor.u32 %v2218, 2147483648
    %v2231 = vxor.u32 %v2219, 2147483648
    %v2232 = vmul.f32 %v2220, 1.442695
    %v2233 = vpow.pop %v2232
    %v2234 = vmul.f32 %v2221, 1.442695
    %v2235 = vpow.pop %v2234
    %v2236 = vmul.f32 %v2222, 1.442695
    %v2237 = vpow.pop %v2236
    %v2238 = vmul.f32 %v2223, 1.442695
    %v2239 = vpow.pop %v2238
    %v2240 = vmul.f32 %v2224, 1.442695
    %v2241 = vpow.pop %v2240
    %v2242 = vmul.f32 %v2225, 1.442695
    %v2243 = vpow.pop %v2242
    %v2244 = vmul.f32 %v2226, 1.442695
    %v2245 = vpow.pop %v2244
    %v2246 = vmul.f32 %v2227, 1.442695
    %v2247 = vpow.pop %v2246
    %v2248 = vmul.f32 %v2228, 1.442695
    %v2249 = vpow.pop %v2248
    %v2250 = vmul.f32 %v2229, 1.442695
    %v2251 = vpow.pop %v2250
    %v2252 = vmul.f32 %v2230, 1.442695
    %v2253 = vpow.pop %v2252
    %v2254 = vmul.f32 %v2231, 1.442695
    %v2255 = vpow.pop %v2254
    %v2256 = vadd.f32 %v2233, 1.0
    %v2257 = vadd.f32 %v2235, 1.0
    %v2258 = vadd.f32 %v2237, 1.0
    %v2259 = vadd.f32 %v2239, 1.0
    %v2260 = vadd.f32 %v2241, 1.0
    %v2261 = vadd.f32 %v2243, 1.0
    %v2262 = vadd.f32 %v2245, 1.0
    %v2263 = vadd.f32 %v2247, 1.0
    %v2264 = vadd.f32 %v2249, 1.0
    %v2265 = vadd.f32 %v2251, 1.0
    %v2266 = vadd.f32 %v2253, 1.0
    %v2267 = vadd.f32 %v2255, 1.0
    %v2268 = vrcp.pop %v2256
    %v2269 = vmul.f32 1.0, %v2268
    %v2270 = vrcp.pop %v2257
    %v2271 = vmul.f32 1.0, %v2270
    %v2272 = vrcp.pop %v2258
    %v2273 = vmul.f32 1.0, %v2272
    %v2274 = vrcp.pop %v2259
    %v2275 = vmul.f32 1.0, %v2274
    %v2276 = vrcp.pop %v2260
    %v2277 = vmul.f32 1.0, %v2276
    %v2278 = vrcp.pop %v2261
    %v2279 = vmul.f32 1.0, %v2278
    %v2280 = vrcp.pop %v2262
    %v2281 = vmul.f32 1.0, %v2280
    %v2282 = vrcp.pop %v2263
    %v2283 = vmul.f32 1.0, %v2282
    %v2284 = vrcp.pop %v2264
    %v2285 = vmul.f32 1.0, %v2284
    %v2286 = vrcp.pop %v2265
    %v2287 = vmul.f32 1.0, %v2286
    %v2288 = vrcp.pop %v2266
    %v2289 = vmul.f32 1.0, %v2288
    %v2290 = vrcp.pop %v2267
    %v2291 = vmul.f32 1.0, %v2290
    %v2292 = vtanh.pop %v2212
    %v2293 = vtanh.pop %v2213
    %v2294 = vtanh.pop %v2214
    %v2295 = vtanh.pop %v2215
    %v2296 = vmul.f32 %v2277, %v2025
    %v2297 = vmul.f32 %v2279, %v2026
    %v2298 = vmul.f32 %v2281, %v2027
    %v2299 = vmul.f32 %v2283, %v2028
    %v2300 = vmul.f32 %v2269, %v2292
    %v2301 = vmul.f32 %v2271, %v2293
    %v2302 = vmul.f32 %v2273, %v2294
    %v2303 = vmul.f32 %v2275, %v2295
    %v2304 = vadd.f32 %v2296, %v2300
    %v2305 = vadd.f32 %v2297, %v2301
    %v2306 = vadd.f32 %v2298, %v2302
    %v2307 = vadd.f32 %v2299, %v2303
    %v2308 = vtanh.pop %v2304
    %v2309 = vtanh.pop %v2305
    %v2310 = vtanh.pop %v2306
    %v2311 = vtanh.pop %v2307
    %v2312 = vmul.f32 %v2285, %v2308
    %v2313 = vmul.f32 %v2287, %v2309
    %v2314 = vmul.f32 %v2289, %v2310
    %v2315 = vmul.f32 %v2291, %v2311
    %s2316 = scalar_lea.vmem [#allocation5], 224
    %2317 = vst [vmem:[%s2316] sm:$0xff] %v2312
    %2318 = vst [vmem:[%s2316 + $0x8] sm:$0xff] %v2313
    %2319 = vst [vmem:[%s2316 + $0x10] sm:$0xff] %v2314
    %2320 = vst [vmem:[%s2316 + $0x18] sm:$0xff] %v2315
    // Predicated region
    $region14: #{tpu_custom_call.1} parent=1 // pred_check
      _
    $region15: #{tpu_custom_call.1} parent=1 // pred_check_branch
      %2322 = sbr.rel (0) target = $region17
    $region16: #{tpu_custom_call.1} parent=1 // pred_region
      %s2324 = ssub.s32 4096, 4096
      %2325 = vsyncadd [#allocation4], %s2324
      %s2326 = sshll.u32 [#allocation5], 4
      %s2327 = int_to_ptr.vmem [resolvable:$true] %s2326
      %2332 = dma.vmem_to_hbm [thread:$0]  %s2327, 4096, %s2, [#allocation4], 128, 128, 8
    $region17: #{tpu_custom_call.1} parent=1 // pred_fallthru
      _
    // Predicated region
    $region18: #{tpu_custom_call.1} parent=1 // pred_check
      _
    $region19: #{tpu_custom_call.1} parent=1 // pred_check_branch
      %2334 = sbr.rel (0) target = $region21
    $region20: #{tpu_custom_call.1} parent=1 // pred_region
      %2335 = dma.done [#allocation4], 4096
    $region21: #{tpu_custom_call.1} parent=1 // pred_fallthru
      _
    %2336 = vsyncpa [#allocation3], 1
    %2337 = vsyncpa [#allocation4], 1

</llo_original>
